<compile_context>
chip_gen: v7x
topology: tpu7x:2x2x1
jax: 0.10.0
libtpu: 0.0.40
codegen_flags: <defaults>
</compile_context>

<pallas_src>
import jax
import jax.numpy as jnp
from jax.experimental import pallas as pl
from jax.experimental.pallas import tpu as pltpu

NUM_LAYERS = 5
BN_EPS = 1e-5
# Layer widths from the module __init__: 784 -> 256 -> 256 -> 256 -> 256 -> 10
LAYER_DIMS = [784, 256, 256, 256, 256, 10]
OUT_PAD = 128          # lane-dense padded width of the final layer
NEG_INF = -1e30        # bias for padded softmax lanes (exp() underflows to 0)


def _cdiv(a, b):
    return -(-a // b)


def _round_up(n, m):
    return _cdiv(n, m) * m


# --------------------------------------------------------------------------- #
# Kernel
# --------------------------------------------------------------------------- #
def mnist_binarized_kernel(x_ref,
                           w0_ref, w1_ref, w2_ref, w3_ref, w4_ref,
                           bn0_ref, bn1_ref, bn2_ref, bn3_ref, bn4_ref,
                           out_ref):
    w_refs = (w0_ref, w1_ref, w2_ref, w3_ref, w4_ref)
    bn_refs = (bn0_ref, bn1_ref, bn2_ref, bn3_ref, bn4_ref)

    # Layer 0: sign(x - 0.5) == (x >= 0.5 ? +1 : -1) exactly; skip the subtract.
    a_bin = jnp.where(x_ref[...] >= 0.5, 1.0, -1.0).astype(jnp.bfloat16)
    out = None
    for k in range(NUM_LAYERS):
        if k > 0:
            # binarize11 on activations; +-1 is exact in bf16 -> full-rate MXU path.
            a_bin = jnp.where(out >= 0.0, 1.0, -1.0).astype(jnp.bfloat16)
        # Weights were pre-binarized / pre-transposed to (in, out) bf16 outside.
        y = jnp.dot(a_bin, w_refs[k][...], preferred_element_type=jnp.float32)
        # Fused BatchNorm (inference): y * scale + bias
        bn = bn_refs[k][...]
        out = y * bn[0:1, :] + bn[1:2, :]

    # Softmax along features; padded lanes carry a ~-inf bias so exp() -> 0.
    m = jnp.max(out, axis=-1, keepdims=True)
    e = jnp.exp(out - m)
    inv = pl.reciprocal(jnp.sum(e, axis=-1, keepdims=True))   # exact, EUP slot
    out_ref[...] = (e * inv).astype(out_ref.dtype)


# --------------------------------------------------------------------------- #
# Parameter preparation (done once, outside the kernel)
# --------------------------------------------------------------------------- #
def prepare_params(weights, bn_raw):
    """weights[k]: (out_k, in_k) f32 (PyTorch layout).
       bn_raw[k]: (gamma, beta, mean, var), each (out_k,) f32.
       Returns:
         w_prepped[k]: (in_k, out_k) bf16 in {-1,+1} (last layer zero-padded to 128 cols)
         bn_prepped[k]: (2, out_k) f32 rows [scale, bias] (last layer padded; bias=-1e30 on pad)
    """
    w_prepped, bn_prepped = [], []
    for k in range(NUM_LAYERS):
        w = weights[k]
        w_bin = jnp.where(w >= 0.0, 1.0, -1.0).astype(jnp.bfloat16).T  # (in, out)
        g, b, mu, v = bn_raw[k]
        scale = (g * jax.lax.rsqrt(v + BN_EPS)).astype(jnp.float32)
        bias = (b - mu * scale).astype(jnp.float32)
        if k == NUM_LAYERS - 1:
            pad = OUT_PAD - w_bin.shape[1]
            # pad with zeros AFTER binarization so padded lanes get y == 0
            w_bin = jnp.pad(w_bin, ((0, 0), (0, pad)))
            scale = jnp.pad(scale, (0, pad))
            bias = jnp.pad(bias, (0, pad), constant_values=NEG_INF)
        w_prepped.append(w_bin)
        bn_prepped.append(jnp.stack([scale, bias], axis=0))
    return w_prepped, bn_prepped


# --------------------------------------------------------------------------- #
# Grid / tile shaping
# --------------------------------------------------------------------------- #
def _choose_tiling(batch, max_tile=1024, min_steps=4):
    """Pick (tile_m, steps, padded_batch):
       - tile_m is a multiple of 16 (bf16 sublane packing) and <= max_tile,
       - the grid has >= min_steps steps when the batch allows it (pipelining),
       - the step count is even when > 1 (v7x megacore gets equal halves),
       - padding is bounded by one tile (no round_up(batch, tile) blowup).
    """
    b16 = _round_up(batch, 16)
    steps = max(min_steps, _cdiv(b16, max_tile))
    tm = _round_up(_cdiv(b16, steps), 16)
    steps = _cdiv(b16, tm)
    if steps > 1 and steps % 2:
        steps += 1               # even grid -> both v7x TensorCores get equal work
    b_pad = steps * tm
    return tm, steps, b_pad


def _vmem_limit_bytes(tm, w_prepped, bn_prepped, out_dtype):
    """Right-size the scoped-VMEM limit from the actual footprint (+ headroom)."""
    in_b = 2 * tm * LAYER_DIMS[0] * 4                              # dbl-buffered f32 input
    out_b = 2 * tm * OUT_PAD * jnp.dtype(out_dtype).itemsize       # dbl-buffered output
    w_b = sum(2 * int(w.size) * 2 for w in w_prepped)              # bf16 weights (2 bufs)
    bn_b = sum(2 * int(b.size) * 4 for b in bn_prepped)            # f32 BN (2 bufs)
    live = 6 * tm * 256 * 4                                        # f32/bf16 intermediates
    limit = in_b + out_b + w_b + bn_b + live + (8 << 20)           # + internal-scratch headroom
    return int(min(max(limit, 32 << 20), 56 << 20))                # stay under v7x's 64 MiB/TC


# --------------------------------------------------------------------------- #
# Wrapper
# --------------------------------------------------------------------------- #
def mnist_binarized_forward(x, w_prepped, bn_prepped, *,
                            max_tile=1024, min_steps=4, out_dtype=jnp.float32):
    """x: (B, 784) f32. Returns (B, 10) softmax probabilities (f32 by default).
       out_dtype=jnp.bfloat16 trims output HBM traffic if downstream tolerates it."""
    batch = x.shape[0]
    tm, steps, b_pad = _choose_tiling(batch, max_tile=max_tile, min_steps=min_steps)
    if b_pad != batch:
        x = jnp.pad(x, ((0, b_pad - batch), (0, 0)))
    grid = (steps,)

    in_specs = [pl.BlockSpec((tm, LAYER_DIMS[0]), lambda i: (i, 0))]
    # Weights + fused BN are small (<1 MB); keep them VMEM-resident across all
    # batch tiles via constant index_maps.
    # (pipeline_mode=pl.Buffered(1) would reclaim their dead second buffer, but
    #  VMEM has ample headroom at tm<=1024, so we keep the default for safety.)
    for w in w_prepped:
        in_specs.append(pl.BlockSpec(w.shape, lambda i: (0, 0)))
    for bn in bn_prepped:
        in_specs.append(pl.BlockSpec(bn.shape, lambda i: (0, 0)))

    out = pl.pallas_call(
        mnist_binarized_kernel,
        out_shape=jax.ShapeDtypeStruct((b_pad, OUT_PAD), out_dtype),
        grid=grid,
        in_specs=in_specs,
        out_specs=pl.BlockSpec((tm, OUT_PAD), lambda i: (i, 0)),
        compiler_params=pltpu.CompilerParams(
            dimension_semantics=("parallel",),      # shards the batch grid on v7x megacore
            vmem_limit_bytes=_vmem_limit_bytes(tm, w_prepped, bn_prepped, out_dtype)),
    )(x, *w_prepped, *bn_prepped)
    return out[:batch, :LAYER_DIMS[-1]].astype(jnp.float32)


# --------------------------------------------------------------------------- #
# Pure-JAX reference (matches the PyTorch module semantics exactly)
# --------------------------------------------------------------------------- #
def _reference_forward(x, weights, bn_raw):
    out = x - 0.5
    for k in range(NUM_LAYERS):
        a = jnp.where(out >= 0.0, 1.0, -1.0)
        w = jnp.where(weights[k] >= 0.0, 1.0, -1.0)
        y = a @ w.T
        g, b, m, v = bn_raw[k]
        out = (y - m) * g / jnp.sqrt(v + BN_EPS) + b
    return jax.nn.softmax(out, axis=1)


if __name__ == "__main__":
    key = jax.random.PRNGKey(0)

    weights = []   # PyTorch layout: (out, in)
    bn_raw = []    # (gamma, beta, mean, var)
    for k in range(NUM_LAYERS):
        d_in, d_out = LAYER_DIMS[k], LAYER_DIMS[k + 1]
        key, kw, kg, kb, km, kv = jax.random.split(key, 6)
        w = jax.random.normal(kw, (d_out, d_in), dtype=jnp.float32)
        weights.append(w)
        gamma = jax.random.uniform(kg, (d_out,), minval=0.5, maxval=1.5)
        # include some negative gammas to exercise the general fused-BN path
        gamma = gamma * jnp.where(jax.random.uniform(kg, (d_out,)) < 0.1, -1.0, 1.0)
        beta = 0.1 * jax.random.normal(kb, (d_out,))
        mean = 0.1 * jax.random.normal(km, (d_out,))
        var = jax.random.uniform(kv, (d_out,), minval=0.5, maxval=1.5)
        bn_raw.append((gamma.astype(jnp.float32), beta.astype(jnp.float32),
                       mean.astype(jnp.float32), var.astype(jnp.float32)))

    w_prepped, bn_prepped = prepare_params(weights, bn_raw)

    # Small check #1: tiny batch (single grid step, padded to one 16-row tile).
    key, kx = jax.random.split(key)
    x_small = jax.random.uniform(kx, (8, LAYER_DIMS[0]), dtype=jnp.float32)
    out_small = jax.block_until_ready(mnist_binarized_forward(x_small, w_prepped, bn_prepped))
    ref_small = _reference_forward(x_small, weights, bn_raw)
    assert out_small.shape == (8, LAYER_DIMS[-1])
    assert jnp.allclose(out_small, ref_small, atol=5e-5, rtol=1e-4), "mismatch vs reference (batch=8)"
    assert jnp.allclose(jnp.sum(out_small, axis=1), 1.0, atol=1e-5), "softmax rows must sum to 1"

    # Small check #2: non-tile-aligned batch -> exercises multi-step even grid
    # (4 steps of 64 rows) and the bounded (<= one tile) padding path.
    key, kx2 = jax.random.split(key)
    x_med = jax.random.uniform(kx2, (200, LAYER_DIMS[0]), dtype=jnp.float32)
    out_med = jax.block_until_ready(mnist_binarized_forward(x_med, w_prepped, bn_prepped))
    ref_med = _reference_forward(x_med, weights, bn_raw)
    assert out_med.shape == (200, LAYER_DIMS[-1])
    assert jnp.allclose(out_med, ref_med, atol=5e-5, rtol=1e-4), "mismatch vs reference (batch=200)"
    assert jnp.allclose(jnp.sum(out_med, axis=1), 1.0, atol=1e-5), "softmax rows must sum to 1"

    print("KERNEL_OK")
</pallas_src>

<mosaic_0001>
module attributes {stable_mosaic.version = 11 : i64} {
  func.func @mnist_binarized_kernel(%arg0: i32, %arg1: memref<16x784xf32, #tpu.memory_space<vmem>>, %arg2: memref<784x256xbf16, #tpu.memory_space<vmem>>, %arg3: memref<256x256xbf16, #tpu.memory_space<vmem>>, %arg4: memref<256x256xbf16, #tpu.memory_space<vmem>>, %arg5: memref<256x256xbf16, #tpu.memory_space<vmem>>, %arg6: memref<256x128xbf16, #tpu.memory_space<vmem>>, %arg7: memref<2x256xf32, #tpu.memory_space<vmem>>, %arg8: memref<2x256xf32, #tpu.memory_space<vmem>>, %arg9: memref<2x256xf32, #tpu.memory_space<vmem>>, %arg10: memref<2x256xf32, #tpu.memory_space<vmem>>, %arg11: memref<2x128xf32, #tpu.memory_space<vmem>>, %arg12: memref<16x128xf32, #tpu.memory_space<vmem>>) attributes {dimension_semantics = [#tpu.dimension_semantics<parallel>], iteration_bounds = array<i64: 1>, scalar_prefetch = 0 : i64, scratch_operands = 0 : i64, tpu.core_type = #tpu.core_type<tc>, window_params = [{transform_indices = @transform_0, window_bounds = array<i64: 16, 784>}, {pipeline_mode = #tpu.pipeline_mode<synchronous>, transform_indices = @transform_1, window_bounds = array<i64: 784, 256>}, {pipeline_mode = #tpu.pipeline_mode<synchronous>, transform_indices = @transform_2, window_bounds = array<i64: 256, 256>}, {pipeline_mode = #tpu.pipeline_mode<synchronous>, transform_indices = @transform_3, window_bounds = array<i64: 256, 256>}, {pipeline_mode = #tpu.pipeline_mode<synchronous>, transform_indices = @transform_4, window_bounds = array<i64: 256, 256>}, {pipeline_mode = #tpu.pipeline_mode<synchronous>, transform_indices = @transform_5, window_bounds = array<i64: 256, 128>}, {pipeline_mode = #tpu.pipeline_mode<synchronous>, transform_indices = @transform_6, window_bounds = array<i64: 2, 256>}, {pipeline_mode = #tpu.pipeline_mode<synchronous>, transform_indices = @transform_7, window_bounds = array<i64: 2, 256>}, {pipeline_mode = #tpu.pipeline_mode<synchronous>, transform_indices = @transform_8, window_bounds = array<i64: 2, 256>}, {pipeline_mode = #tpu.pipeline_mode<synchronous>, transform_indices = @transform_9, window_bounds = array<i64: 2, 256>}, {pipeline_mode = #tpu.pipeline_mode<synchronous>, transform_indices = @transform_10, window_bounds = array<i64: 2, 128>}, {transform_indices = @transform_11, window_bounds = array<i64: 16, 128>}]} {
    %c0 = arith.constant 0 : index
    %c0_0 = arith.constant 0 : index
    %0 = vector.load %arg1[%c0, %c0_0] : memref<16x784xf32, #tpu.memory_space<vmem>>, vector<16x784xf32>
    %cst = arith.constant 5.000000e-01 : f32
    %1 = vector.broadcast %cst : f32 to vector<16x784xf32>
    %2 = arith.cmpf oge, %0, %1 : vector<16x784xf32>
    %cst_1 = arith.constant 1.000000e+00 : f32
    %cst_2 = arith.constant -1.000000e+00 : f32
    %3 = vector.broadcast %cst_1 : f32 to vector<16x784xf32>
    %4 = vector.broadcast %cst_2 : f32 to vector<16x784xf32>
    %5 = arith.select %2, %3, %4 : vector<16x784xi1>, vector<16x784xf32>
    %6 = arith.truncf %5 : vector<16x784xf32> to vector<16x784xbf16>
    %c0_3 = arith.constant 0 : index
    %c0_4 = arith.constant 0 : index
    %7 = vector.load %arg2[%c0_3, %c0_4] : memref<784x256xbf16, #tpu.memory_space<vmem>>, vector<784x256xbf16>
    %cst_5 = arith.constant dense<0.000000e+00> : vector<16x256xf32>
    %8 = tpu.matmul %6, %7, %cst_5 {dimension_numbers = #tpu.dot_dimension_numbers<[1], [0], [0], [1], [0, 0, 1, 1], [], []>} : vector<16x784xbf16>, vector<784x256xbf16>, vector<16x256xf32> -> vector<16x256xf32>
    %c0_6 = arith.constant 0 : index
    %c0_7 = arith.constant 0 : index
    %9 = vector.load %arg7[%c0_6, %c0_7] : memref<2x256xf32, #tpu.memory_space<vmem>>, vector<2x256xf32>
    %10 = vector.extract_strided_slice %9 {offsets = [0, 0], sizes = [1, 256], strides = [1, 1]} : vector<2x256xf32> to vector<1x256xf32>
    %11 = vector.broadcast %10 : vector<1x256xf32> to vector<16x256xf32>
    %12 = arith.mulf %8, %11 : vector<16x256xf32>
    %13 = vector.extract_strided_slice %9 {offsets = [1, 0], sizes = [1, 256], strides = [1, 1]} : vector<2x256xf32> to vector<1x256xf32>
    %14 = vector.broadcast %13 : vector<1x256xf32> to vector<16x256xf32>
    %15 = arith.addf %12, %14 : vector<16x256xf32>
    %cst_8 = arith.constant 0.000000e+00 : f32
    %16 = vector.broadcast %cst_8 : f32 to vector<16x256xf32>
    %17 = arith.cmpf oge, %15, %16 : vector<16x256xf32>
    %cst_9 = arith.constant 1.000000e+00 : f32
    %cst_10 = arith.constant -1.000000e+00 : f32
    %18 = vector.broadcast %cst_9 : f32 to vector<16x256xf32>
    %19 = vector.broadcast %cst_10 : f32 to vector<16x256xf32>
    %20 = arith.select %17, %18, %19 : vector<16x256xi1>, vector<16x256xf32>
    %21 = arith.truncf %20 : vector<16x256xf32> to vector<16x256xbf16>
    %c0_11 = arith.constant 0 : index
    %c0_12 = arith.constant 0 : index
    %22 = vector.load %arg3[%c0_11, %c0_12] : memref<256x256xbf16, #tpu.memory_space<vmem>>, vector<256x256xbf16>
    %cst_13 = arith.constant dense<0.000000e+00> : vector<16x256xf32>
    %23 = tpu.matmul %21, %22, %cst_13 {dimension_numbers = #tpu.dot_dimension_numbers<[1], [0], [0], [1], [0, 0, 1, 1], [], []>} : vector<16x256xbf16>, vector<256x256xbf16>, vector<16x256xf32> -> vector<16x256xf32>
    %c0_14 = arith.constant 0 : index
    %c0_15 = arith.constant 0 : index
    %24 = vector.load %arg8[%c0_14, %c0_15] : memref<2x256xf32, #tpu.memory_space<vmem>>, vector<2x256xf32>
    %25 = vector.extract_strided_slice %24 {offsets = [0, 0], sizes = [1, 256], strides = [1, 1]} : vector<2x256xf32> to vector<1x256xf32>
    %26 = vector.broadcast %25 : vector<1x256xf32> to vector<16x256xf32>
    %27 = arith.mulf %23, %26 : vector<16x256xf32>
    %28 = vector.extract_strided_slice %24 {offsets = [1, 0], sizes = [1, 256], strides = [1, 1]} : vector<2x256xf32> to vector<1x256xf32>
    %29 = vector.broadcast %28 : vector<1x256xf32> to vector<16x256xf32>
    %30 = arith.addf %27, %29 : vector<16x256xf32>
    %cst_16 = arith.constant 0.000000e+00 : f32
    %31 = vector.broadcast %cst_16 : f32 to vector<16x256xf32>
    %32 = arith.cmpf oge, %30, %31 : vector<16x256xf32>
    %cst_17 = arith.constant 1.000000e+00 : f32
    %cst_18 = arith.constant -1.000000e+00 : f32
    %33 = vector.broadcast %cst_17 : f32 to vector<16x256xf32>
    %34 = vector.broadcast %cst_18 : f32 to vector<16x256xf32>
    %35 = arith.select %32, %33, %34 : vector<16x256xi1>, vector<16x256xf32>
    %36 = arith.truncf %35 : vector<16x256xf32> to vector<16x256xbf16>
    %c0_19 = arith.constant 0 : index
    %c0_20 = arith.constant 0 : index
    %37 = vector.load %arg4[%c0_19, %c0_20] : memref<256x256xbf16, #tpu.memory_space<vmem>>, vector<256x256xbf16>
    %cst_21 = arith.constant dense<0.000000e+00> : vector<16x256xf32>
    %38 = tpu.matmul %36, %37, %cst_21 {dimension_numbers = #tpu.dot_dimension_numbers<[1], [0], [0], [1], [0, 0, 1, 1], [], []>} : vector<16x256xbf16>, vector<256x256xbf16>, vector<16x256xf32> -> vector<16x256xf32>
    %c0_22 = arith.constant 0 : index
    %c0_23 = arith.constant 0 : index
    %39 = vector.load %arg9[%c0_22, %c0_23] : memref<2x256xf32, #tpu.memory_space<vmem>>, vector<2x256xf32>
    %40 = vector.extract_strided_slice %39 {offsets = [0, 0], sizes = [1, 256], strides = [1, 1]} : vector<2x256xf32> to vector<1x256xf32>
    %41 = vector.broadcast %40 : vector<1x256xf32> to vector<16x256xf32>
    %42 = arith.mulf %38, %41 : vector<16x256xf32>
    %43 = vector.extract_strided_slice %39 {offsets = [1, 0], sizes = [1, 256], strides = [1, 1]} : vector<2x256xf32> to vector<1x256xf32>
    %44 = vector.broadcast %43 : vector<1x256xf32> to vector<16x256xf32>
    %45 = arith.addf %42, %44 : vector<16x256xf32>
    %cst_24 = arith.constant 0.000000e+00 : f32
    %46 = vector.broadcast %cst_24 : f32 to vector<16x256xf32>
    %47 = arith.cmpf oge, %45, %46 : vector<16x256xf32>
    %cst_25 = arith.constant 1.000000e+00 : f32
    %cst_26 = arith.constant -1.000000e+00 : f32
    %48 = vector.broadcast %cst_25 : f32 to vector<16x256xf32>
    %49 = vector.broadcast %cst_26 : f32 to vector<16x256xf32>
    %50 = arith.select %47, %48, %49 : vector<16x256xi1>, vector<16x256xf32>
    %51 = arith.truncf %50 : vector<16x256xf32> to vector<16x256xbf16>
    %c0_27 = arith.constant 0 : index
    %c0_28 = arith.constant 0 : index
    %52 = vector.load %arg5[%c0_27, %c0_28] : memref<256x256xbf16, #tpu.memory_space<vmem>>, vector<256x256xbf16>
    %cst_29 = arith.constant dense<0.000000e+00> : vector<16x256xf32>
    %53 = tpu.matmul %51, %52, %cst_29 {dimension_numbers = #tpu.dot_dimension_numbers<[1], [0], [0], [1], [0, 0, 1, 1], [], []>} : vector<16x256xbf16>, vector<256x256xbf16>, vector<16x256xf32> -> vector<16x256xf32>
    %c0_30 = arith.constant 0 : index
    %c0_31 = arith.constant 0 : index
    %54 = vector.load %arg10[%c0_30, %c0_31] : memref<2x256xf32, #tpu.memory_space<vmem>>, vector<2x256xf32>
    %55 = vector.extract_strided_slice %54 {offsets = [0, 0], sizes = [1, 256], strides = [1, 1]} : vector<2x256xf32> to vector<1x256xf32>
    %56 = vector.broadcast %55 : vector<1x256xf32> to vector<16x256xf32>
    %57 = arith.mulf %53, %56 : vector<16x256xf32>
    %58 = vector.extract_strided_slice %54 {offsets = [1, 0], sizes = [1, 256], strides = [1, 1]} : vector<2x256xf32> to vector<1x256xf32>
    %59 = vector.broadcast %58 : vector<1x256xf32> to vector<16x256xf32>
    %60 = arith.addf %57, %59 : vector<16x256xf32>
    %cst_32 = arith.constant 0.000000e+00 : f32
    %61 = vector.broadcast %cst_32 : f32 to vector<16x256xf32>
    %62 = arith.cmpf oge, %60, %61 : vector<16x256xf32>
    %cst_33 = arith.constant 1.000000e+00 : f32
    %cst_34 = arith.constant -1.000000e+00 : f32
    %63 = vector.broadcast %cst_33 : f32 to vector<16x256xf32>
    %64 = vector.broadcast %cst_34 : f32 to vector<16x256xf32>
    %65 = arith.select %62, %63, %64 : vector<16x256xi1>, vector<16x256xf32>
    %66 = arith.truncf %65 : vector<16x256xf32> to vector<16x256xbf16>
    %c0_35 = arith.constant 0 : index
    %c0_36 = arith.constant 0 : index
    %67 = vector.load %arg6[%c0_35, %c0_36] : memref<256x128xbf16, #tpu.memory_space<vmem>>, vector<256x128xbf16>
    %cst_37 = arith.constant dense<0.000000e+00> : vector<16x128xf32>
    %68 = tpu.matmul %66, %67, %cst_37 {dimension_numbers = #tpu.dot_dimension_numbers<[1], [0], [0], [1], [0, 0, 1, 1], [], []>} : vector<16x256xbf16>, vector<256x128xbf16>, vector<16x128xf32> -> vector<16x128xf32>
    %c0_38 = arith.constant 0 : index
    %c0_39 = arith.constant 0 : index
    %69 = vector.load %arg11[%c0_38, %c0_39] : memref<2x128xf32, #tpu.memory_space<vmem>>, vector<2x128xf32>
    %70 = vector.extract_strided_slice %69 {offsets = [0, 0], sizes = [1, 128], strides = [1, 1]} : vector<2x128xf32> to vector<1x128xf32>
    %71 = vector.broadcast %70 : vector<1x128xf32> to vector<16x128xf32>
    %72 = arith.mulf %68, %71 : vector<16x128xf32>
    %73 = vector.extract_strided_slice %69 {offsets = [1, 0], sizes = [1, 128], strides = [1, 1]} : vector<2x128xf32> to vector<1x128xf32>
    %74 = vector.broadcast %73 : vector<1x128xf32> to vector<16x128xf32>
    %75 = arith.addf %72, %74 : vector<16x128xf32>
    %cst_40 = arith.constant dense<0xFF800000> : vector<16xf32>
    %76 = vector.multi_reduction <maximumf>, %75, %cst_40 [1] : vector<16x128xf32> to vector<16xf32>
    %77 = vector.shape_cast %76 : vector<16xf32> to vector<16x1xf32>
    %78 = vector.broadcast %77 : vector<16x1xf32> to vector<16x128xf32>
    %79 = arith.subf %75, %78 : vector<16x128xf32>
    %80 = math.exp %79 : vector<16x128xf32>
    %cst_41 = arith.constant dense<0.000000e+00> : vector<16xf32>
    %81 = vector.multi_reduction <add>, %80, %cst_41 [1] : vector<16x128xf32> to vector<16xf32>
    %82 = vector.shape_cast %81 : vector<16xf32> to vector<16x1xf32>
    %83 = tpu.reciprocal %82 : vector<16x1xf32> -> vector<16x1xf32>
    %84 = vector.broadcast %83 : vector<16x1xf32> to vector<16x128xf32>
    %85 = arith.mulf %80, %84 : vector<16x128xf32>
    %c0_42 = arith.constant 0 : index
    %c0_43 = arith.constant 0 : index
    %86 = vector.load %arg12[%c0_42, %c0_43] : memref<16x128xf32, #tpu.memory_space<vmem>>, vector<16x128xf32>
    tpu.vector_store %arg12[%c0_42, %c0_43], %85 {strides = array<i32>} : memref<16x128xf32, #tpu.memory_space<vmem>>, vector<16x128xf32>,
    return
  }
  func.func @transform_0(%arg0: i32) -> (i32, i32) {
    %c0_i32 = arith.constant 0 : i32
    %c0_i32_0 = arith.constant 0 : i32
    return %arg0, %c0_i32 : i32, i32
  }
  func.func @transform_1(%arg0: i32) -> (i32, i32) {
    %c0_i32 = arith.constant 0 : i32
    %c0_i32_0 = arith.constant 0 : i32
    %c0_i32_1 = arith.constant 0 : i32
    return %c0_i32, %c0_i32_0 : i32, i32
  }
  func.func @transform_2(%arg0: i32) -> (i32, i32) {
    %c0_i32 = arith.constant 0 : i32
    %c0_i32_0 = arith.constant 0 : i32
    %c0_i32_1 = arith.constant 0 : i32
    return %c0_i32, %c0_i32_0 : i32, i32
  }
  func.func @transform_3(%arg0: i32) -> (i32, i32) {
    %c0_i32 = arith.constant 0 : i32
    %c0_i32_0 = arith.constant 0 : i32
    %c0_i32_1 = arith.constant 0 : i32
    return %c0_i32, %c0_i32_0 : i32, i32
  }
  func.func @transform_4(%arg0: i32) -> (i32, i32) {
    %c0_i32 = arith.constant 0 : i32
    %c0_i32_0 = arith.constant 0 : i32
    %c0_i32_1 = arith.constant 0 : i32
    return %c0_i32, %c0_i32_0 : i32, i32
  }
  func.func @transform_5(%arg0: i32) -> (i32, i32) {
    %c0_i32 = arith.constant 0 : i32
    %c0_i32_0 = arith.constant 0 : i32
    %c0_i32_1 = arith.constant 0 : i32
    return %c0_i32, %c0_i32_0 : i32, i32
  }
  func.func @transform_6(%arg0: i32) -> (i32, i32) {
    %c0_i32 = arith.constant 0 : i32
    %c0_i32_0 = arith.constant 0 : i32
    %c0_i32_1 = arith.constant 0 : i32
    return %c0_i32, %c0_i32_0 : i32, i32
  }
  func.func @transform_7(%arg0: i32) -> (i32, i32) {
    %c0_i32 = arith.constant 0 : i32
    %c0_i32_0 = arith.constant 0 : i32
    %c0_i32_1 = arith.constant 0 : i32
    return %c0_i32, %c0_i32_0 : i32, i32
  }
  func.func @transform_8(%arg0: i32) -> (i32, i32) {
    %c0_i32 = arith.constant 0 : i32
    %c0_i32_0 = arith.constant 0 : i32
    %c0_i32_1 = arith.constant 0 : i32
    return %c0_i32, %c0_i32_0 : i32, i32
  }
  func.func @transform_9(%arg0: i32) -> (i32, i32) {
    %c0_i32 = arith.constant 0 : i32
    %c0_i32_0 = arith.constant 0 : i32
    %c0_i32_1 = arith.constant 0 : i32
    return %c0_i32, %c0_i32_0 : i32, i32
  }
  func.func @transform_10(%arg0: i32) -> (i32, i32) {
    %c0_i32 = arith.constant 0 : i32
    %c0_i32_0 = arith.constant 0 : i32
    %c0_i32_1 = arith.constant 0 : i32
    return %c0_i32, %c0_i32_0 : i32, i32
  }
  func.func @transform_11(%arg0: i32) -> (i32, i32) {
    %c0_i32 = arith.constant 0 : i32
    %c0_i32_0 = arith.constant 0 : i32
    return %arg0, %c0_i32 : i32, i32
  }
}

</mosaic_0001>

<llo_original>
// kernel: tpu_custom_call.1
$region0: #{tpu_custom_call.1}
  #allocation0 [shape = 'u32[]', space=smem, size = 0x4, offset = 0x4, fixed_abs, tag = 'smem constant byte address 0x4 - core index']
  #allocation1 [shape = 'u32[144,128]{1,0:T(1,128)}', space=vmem, size = 0x12000, scoped, tag = 'internal scratch']
  %s0 = inlined_call_operand.hbm [shape: f32[16,784], index: 0, kind: input, shape index: {}]
  %s1 = inlined_call_operand.hbm [shape: bf16[784,256], index: 1, kind: input, shape index: {}]
  %s2 = inlined_call_operand.hbm [shape: bf16[256,256], index: 2, kind: input, shape index: {}]
  %s3 = inlined_call_operand.hbm [shape: bf16[256,256], index: 3, kind: input, shape index: {}]
  %s4 = inlined_call_operand.hbm [shape: bf16[256,256], index: 4, kind: input, shape index: {}]
  %s5 = inlined_call_operand.hbm [shape: bf16[256,128], index: 5, kind: input, shape index: {}]
  %s6 = inlined_call_operand.vmem [shape: f32[2,256], index: 6, kind: input, shape index: {}]
  %s7 = inlined_call_operand.vmem [shape: f32[2,256], index: 7, kind: input, shape index: {}]
  %s8 = inlined_call_operand.vmem [shape: f32[2,256], index: 8, kind: input, shape index: {}]
  %s9 = inlined_call_operand.vmem [shape: f32[2,256], index: 9, kind: input, shape index: {}]
  %s10 = inlined_call_operand.vmem [shape: f32[2,128], index: 10, kind: input, shape index: {}]
  %s11 = inlined_call_operand.hbm [shape: f32[16,128], index: 11, kind: output, shape index: {}]
  %s12 = sld [smem:[#allocation0]]
  $region78: #{tpu_custom_call.1} parent=0
    _
  %s14 = ssub.s32 1, %s12
  %s15 = scalar_select 0, %s14, %s12
  $region1: #{tpu_custom_call.1} parent=0
    #allocation2 [shape = 'u8[57344]{0}', space=vmem, size = 0xe000, scoped, tag = 'input window, operand 0, single buffered']
    #allocation3 [shape = 's32[1]{0}', space=sflag, size = 0x4, scoped, tag = 'scoped memory for tpu_custom_call.1']
    #allocation4 [shape = 's32[1]{0}', space=sflag, size = 0x4, scoped, tag = 'scoped memory for tpu_custom_call.1']
    #allocation5 [shape = 'u8[401408]{0}', space=vmem, size = 0x62000, scoped, tag = 'input window, operand 1, single buffered']
    #allocation6 [shape = 's32[1]{0}', space=sflag, size = 0x4, scoped, tag = 'scoped memory for tpu_custom_call.1']
    #allocation7 [shape = 'u8[131072]{0}', space=vmem, size = 0x20000, scoped, tag = 'input window, operand 2, single buffered']
    #allocation8 [shape = 'u8[131072]{0}', space=vmem, size = 0x20000, scoped, tag = 'input window, operand 3, single buffered']
    #allocation9 [shape = 's32[1]{0}', space=sflag, size = 0x4, scoped, tag = 'scoped memory for tpu_custom_call.1']
    #allocation10 [shape = 'u8[131072]{0}', space=vmem, size = 0x20000, scoped, tag = 'input window, operand 4, single buffered']
    #allocation11 [shape = 'u8[65536]{0}', space=vmem, size = 0x10000, scoped, tag = 'input window, operand 5, single buffered']
    #allocation12 [shape = 's32[1]{0}', space=sflag, size = 0x4, scoped, tag = 'scoped memory for tpu_custom_call.1']
    #allocation13 [shape = 'u8[8192]{0}', space=vmem, size = 0x2000, scoped, tag = 'output window, operand 0, single buffered']
    %16 = vsyncpa [#allocation3], 0
    %17 = vsyncpa [#allocation6], 0
    %18 = vsyncpa [#allocation9], 0
    %19 = vsyncpa [#allocation12], 0
    %20 = vsyncpa [#allocation4], 0
    // Predicated region
    $region2: #{tpu_custom_call.1} parent=1 // pred_check
      _
    $region3: #{tpu_custom_call.1} parent=1 // pred_check_branch
      %22 = sbr.rel (0) target = $region5
    $region4: #{tpu_custom_call.1} parent=1 // pred_region
      %s24 = ssub.s32 1792, 1792
      %25 = vsyncadd [#allocation3], %s24
      %s26 = sshll.u32 [#allocation2], 4
      %s27 = int_to_ptr.vmem [resolvable:$true] %s26
      %32 = dma.hbm_to_vmem [thread:$0]  %s0, 1792, %s27, [#allocation3], 896, 896, 56
    $region5: #{tpu_custom_call.1} parent=1 // pred_fallthru
      _
    // Predicated region
    $region6: #{tpu_custom_call.1} parent=1 // pred_check
      _
    $region7: #{tpu_custom_call.1} parent=1 // pred_check_branch
      %34 = sbr.rel (0) target = $region9
    $region8: #{tpu_custom_call.1} parent=1 // pred_region
      %s36 = ssub.s32 12544, 12544
      %37 = vsyncadd [#allocation6], %s36
      %s38 = sshll.u32 [#allocation5], 4
      %s39 = int_to_ptr.vmem [resolvable:$true] %s38
      %44 = dma.hbm_to_vmem [thread:$0]  %s1, 12544, %s39, [#allocation6], 128, 128, 8
    $region9: #{tpu_custom_call.1} parent=1 // pred_fallthru
      _
    // Predicated region
    $region10: #{tpu_custom_call.1} parent=1 // pred_check
      _
    $region11: #{tpu_custom_call.1} parent=1 // pred_check_branch
      %46 = sbr.rel (0) target = $region13
    $region12: #{tpu_custom_call.1} parent=1 // pred_region
      %s48 = ssub.s32 4096, 4096
      %49 = vsyncadd [#allocation6], %s48
      %s50 = sshll.u32 [#allocation7], 4
      %s51 = int_to_ptr.vmem [resolvable:$true] %s50
      %56 = dma.hbm_to_vmem [thread:$0]  %s2, 4096, %s51, [#allocation6], 128, 128, 8
    $region13: #{tpu_custom_call.1} parent=1 // pred_fallthru
      _
    // Predicated region
    $region14: #{tpu_custom_call.1} parent=1 // pred_check
      _
    $region15: #{tpu_custom_call.1} parent=1 // pred_check_branch
      %58 = sbr.rel (0) target = $region17
    $region16: #{tpu_custom_call.1} parent=1 // pred_region
      %s60 = ssub.s32 4096, 4096
      %61 = vsyncadd [#allocation9], %s60
      %s62 = sshll.u32 [#allocation8], 4
      %s63 = int_to_ptr.vmem [resolvable:$true] %s62
      %68 = dma.hbm_to_vmem [thread:$0]  %s3, 4096, %s63, [#allocation9], 128, 128, 8
    $region17: #{tpu_custom_call.1} parent=1 // pred_fallthru
      _
    // Predicated region
    $region18: #{tpu_custom_call.1} parent=1 // pred_check
      _
    $region19: #{tpu_custom_call.1} parent=1 // pred_check_branch
      %70 = sbr.rel (0) target = $region21
    $region20: #{tpu_custom_call.1} parent=1 // pred_region
      %s72 = ssub.s32 4096, 4096
      %73 = vsyncadd [#allocation9], %s72
      %s74 = sshll.u32 [#allocation10], 4
      %s75 = int_to_ptr.vmem [resolvable:$true] %s74
      %80 = dma.hbm_to_vmem [thread:$0]  %s4, 4096, %s75, [#allocation9], 128, 128, 8
    $region21: #{tpu_custom_call.1} parent=1 // pred_fallthru
      _
    // Predicated region
    $region22: #{tpu_custom_call.1} parent=1 // pred_check
      _
    $region23: #{tpu_custom_call.1} parent=1 // pred_check_branch
      %82 = sbr.rel (0) target = $region25
    $region24: #{tpu_custom_call.1} parent=1 // pred_region
      %s84 = ssub.s32 2048, 2048
      %85 = vsyncadd [#allocation12], %s84
      %s86 = sshll.u32 [#allocation11], 4
      %s87 = int_to_ptr.vmem [resolvable:$true] %s86
      %92 = dma.hbm_to_vmem [thread:$0]  %s5, 2048, %s87, [#allocation12], 64, 64, 4
    $region25: #{tpu_custom_call.1} parent=1 // pred_fallthru
      _
    // Predicated region
    $region26: #{tpu_custom_call.1} parent=1 // pred_check
      _
    $region27: #{tpu_custom_call.1} parent=1 // pred_check_branch
      %94 = sbr.rel (0) target = $region29
    $region28: #{tpu_custom_call.1} parent=1 // pred_region
      _
    $region29: #{tpu_custom_call.1} parent=1 // pred_fallthru
      _
    // Predicated region
    $region30: #{tpu_custom_call.1} parent=1 // pred_check
      _
    $region31: #{tpu_custom_call.1} parent=1 // pred_check_branch
      %96 = sbr.rel (0) target = $region33
    $region32: #{tpu_custom_call.1} parent=1 // pred_region
      _
    $region33: #{tpu_custom_call.1} parent=1 // pred_fallthru
      _
    // Predicated region
    $region34: #{tpu_custom_call.1} parent=1 // pred_check
      _
    $region35: #{tpu_custom_call.1} parent=1 // pred_check_branch
      %98 = sbr.rel (0) target = $region37
    $region36: #{tpu_custom_call.1} parent=1 // pred_region
      _
    $region37: #{tpu_custom_call.1} parent=1 // pred_fallthru
      _
    // Predicated region
    $region38: #{tpu_custom_call.1} parent=1 // pred_check
      _
    $region39: #{tpu_custom_call.1} parent=1 // pred_check_branch
      %100 = sbr.rel (0) target = $region41
    $region40: #{tpu_custom_call.1} parent=1 // pred_region
      _
    $region41: #{tpu_custom_call.1} parent=1 // pred_fallthru
      _
    // Predicated region
    $region42: #{tpu_custom_call.1} parent=1 // pred_check
      _
    $region43: #{tpu_custom_call.1} parent=1 // pred_check_branch
      %102 = sbr.rel (0) target = $region45
    $region44: #{tpu_custom_call.1} parent=1 // pred_region
      _
    $region45: #{tpu_custom_call.1} parent=1 // pred_fallthru
      _
    // Predicated region
    $region46: #{tpu_custom_call.1} parent=1 // pred_check
      _
    $region47: #{tpu_custom_call.1} parent=1 // pred_check_branch
      %104 = sbr.rel (0) target = $region49
    $region48: #{tpu_custom_call.1} parent=1 // pred_region
      %105 = dma.done [#allocation3], 1792
    $region49: #{tpu_custom_call.1} parent=1 // pred_fallthru
      _
    // Predicated region
    $region50: #{tpu_custom_call.1} parent=1 // pred_check
      _
    $region51: #{tpu_custom_call.1} parent=1 // pred_check_branch
      %107 = sbr.rel (0) target = $region53
    $region52: #{tpu_custom_call.1} parent=1 // pred_region
      %108 = dma.done [#allocation6], 12544
    $region53: #{tpu_custom_call.1} parent=1 // pred_fallthru
      _
    // Predicated region
    $region54: #{tpu_custom_call.1} parent=1 // pred_check
      _
    $region55: #{tpu_custom_call.1} parent=1 // pred_check_branch
      %110 = sbr.rel (0) target = $region57
    $region56: #{tpu_custom_call.1} parent=1 // pred_region
      %111 = dma.done [#allocation6], 4096
    $region57: #{tpu_custom_call.1} parent=1 // pred_fallthru
      _
    // Predicated region
    $region58: #{tpu_custom_call.1} parent=1 // pred_check
      _
    $region59: #{tpu_custom_call.1} parent=1 // pred_check_branch
      %113 = sbr.rel (0) target = $region61
    $region60: #{tpu_custom_call.1} parent=1 // pred_region
      %114 = dma.done [#allocation9], 4096
    $region61: #{tpu_custom_call.1} parent=1 // pred_fallthru
      _
    // Predicated region
    $region62: #{tpu_custom_call.1} parent=1 // pred_check
      _
    $region63: #{tpu_custom_call.1} parent=1 // pred_check_branch
      %116 = sbr.rel (0) target = $region65
    $region64: #{tpu_custom_call.1} parent=1 // pred_region
      %117 = dma.done [#allocation9], 4096
    $region65: #{tpu_custom_call.1} parent=1 // pred_fallthru
      _
    // Predicated region
    $region66: #{tpu_custom_call.1} parent=1 // pred_check
      _
    $region67: #{tpu_custom_call.1} parent=1 // pred_check_branch
      %119 = sbr.rel (0) target = $region69
    $region68: #{tpu_custom_call.1} parent=1 // pred_region
      %120 = dma.done [#allocation12], 2048
    $region69: #{tpu_custom_call.1} parent=1 // pred_fallthru
      _
    %v122 = vld [vmem:[#allocation2] sm:$0xff]
    %v123 = vld [vmem:[#allocation2 + $0x8] sm:$0xff]
    %v124 = vld [vmem:[#allocation2 + $0x10] sm:$0xff]
    %v125 = vld [vmem:[#allocation2 + $0x18] sm:$0xff]
    %v126 = vld [vmem:[#allocation2 + $0x20] sm:$0xff]
    %v127 = vld [vmem:[#allocation2 + $0x28] sm:$0xff]
    %v128 = vld [vmem:[#allocation2 + $0x30] sm:$0xff]
    %v129 = vld [vmem:[#allocation2 + $0x38] sm:$0xff]
    %v130 = vld [vmem:[#allocation2 + $0x40] sm:$0xff]
    %v131 = vld [vmem:[#allocation2 + $0x48] sm:$0xff]
    %v132 = vld [vmem:[#allocation2 + $0x50] sm:$0xff]
    %v133 = vld [vmem:[#allocation2 + $0x58] sm:$0xff]
    %v134 = vld [vmem:[#allocation2 + $0x60] sm:$0xff]
    %v135 = vld [vmem:[#allocation2 + $0x68] sm:$0xff]
    %vm136 = vcmp.ge.f32.partialorder %v122, 0.5
    %vm137 = vcmp.ge.f32.partialorder %v123, 0.5
    %vm138 = vcmp.ge.f32.partialorder %v124, 0.5
    %vm139 = vcmp.ge.f32.partialorder %v125, 0.5
    %vm140 = vcmp.ge.f32.partialorder %v126, 0.5
    %vm141 = vcmp.ge.f32.partialorder %v127, 0.5
    %vm142 = vcmp.ge.f32.partialorder %v128, 0.5
    %vm143 = vcmp.ge.f32.partialorder %v129, 0.5
    %vm144 = vcmp.ge.f32.partialorder %v130, 0.5
    %vm145 = vcmp.ge.f32.partialorder %v131, 0.5
    %vm146 = vcmp.ge.f32.partialorder %v132, 0.5
    %vm147 = vcmp.ge.f32.partialorder %v133, 0.5
    %vm148 = vcmp.ge.f32.partialorder %v134, 0.5
    %vm149 = vcmp.ge.f32.partialorder %v135, 0.5
    %v150 = vsel %vm136, 1.0, -1.0
    %v151 = vsel %vm137, 1.0, -1.0
    %v152 = vsel %vm138, 1.0, -1.0
    %v153 = vsel %vm139, 1.0, -1.0
    %v154 = vsel %vm140, 1.0, -1.0
    %v155 = vsel %vm141, 1.0, -1.0
    %v156 = vsel %vm142, 1.0, -1.0
    %v157 = vsel %vm143, 1.0, -1.0
    %v158 = vsel %vm144, 1.0, -1.0
    %v159 = vsel %vm145, 1.0, -1.0
    %v160 = vsel %vm146, 1.0, -1.0
    %v161 = vsel %vm147, 1.0, -1.0
    %v162 = vsel %vm148, 1.0, -1.0
    %v163 = vsel %vm149, 1.0, -1.0
    %v164 = vpack.c.bf16 %v157, %v150
    %v165 = vpack.c.bf16 %v158, %v151
    %v166 = vpack.c.bf16 %v159, %v152
    %v167 = vpack.c.bf16 %v160, %v153
    %v168 = vpack.c.bf16 %v161, %v154
    %v169 = vpack.c.bf16 %v162, %v155
    %v170 = vpack.c.bf16 %v163, %v156
    %v171 = vld [vmem:[#allocation5] sm:$0xff]
    %v172 = vld [vmem:[#allocation5 + $0x8] sm:$0xff]
    %v173 = vld [vmem:[#allocation5 + $0x10] sm:$0xff]
    %v174 = vld [vmem:[#allocation5 + $0x18] sm:$0xff]
    %v175 = vld [vmem:[#allocation5 + $0x20] sm:$0xff]
    %v176 = vld [vmem:[#allocation5 + $0x28] sm:$0xff]
    %v177 = vld [vmem:[#allocation5 + $0x30] sm:$0xff]
    %v178 = vld [vmem:[#allocation5 + $0x38] sm:$0xff]
    %v179 = vld [vmem:[#allocation5 + $0x40] sm:$0xff]
    %v180 = vld [vmem:[#allocation5 + $0x48] sm:$0xff]
    %v181 = vld [vmem:[#allocation5 + $0x50] sm:$0xff]
    %v182 = vld [vmem:[#allocation5 + $0x58] sm:$0xff]
    %v183 = vld [vmem:[#allocation5 + $0x60] sm:$0xff]
    %v184 = vld [vmem:[#allocation5 + $0x68] sm:$0xff]
    %v185 = vld [vmem:[#allocation5 + $0x70] sm:$0xff]
    %v186 = vld [vmem:[#allocation5 + $0x78] sm:$0xff]
    %v187 = vld [vmem:[#allocation5 + $0x80] sm:$0xff]
    %v188 = vld [vmem:[#allocation5 + $0x88] sm:$0xff]
    %v189 = vld [vmem:[#allocation5 + $0x90] sm:$0xff]
    %v190 = vld [vmem:[#allocation5 + $0x98] sm:$0xff]
    %v191 = vld [vmem:[#allocation5 + $0xa0] sm:$0xff]
    %v192 = vld [vmem:[#allocation5 + $0xa8] sm:$0xff]
    %v193 = vld [vmem:[#allocation5 + $0xb0] sm:$0xff]
    %v194 = vld [vmem:[#allocation5 + $0xb8] sm:$0xff]
    %v195 = vld [vmem:[#allocation5 + $0xc0] sm:$0xff]
    %v196 = vld [vmem:[#allocation5 + $0xc8] sm:$0xff]
    %v197 = vld [vmem:[#allocation5 + $0xd0] sm:$0xff]
    %v198 = vld [vmem:[#allocation5 + $0xd8] sm:$0xff]
    %v199 = vld [vmem:[#allocation5 + $0xe0] sm:$0xff]
    %v200 = vld [vmem:[#allocation5 + $0xe8] sm:$0xff]
    %v201 = vld [vmem:[#allocation5 + $0xf0] sm:$0xff]
    %v202 = vld [vmem:[#allocation5 + $0xf8] sm:$0xff]
    %v203 = vld [vmem:[#allocation5 + $0x100] sm:$0xff]
    %v204 = vld [vmem:[#allocation5 + $0x108] sm:$0xff]
    %v205 = vld [vmem:[#allocation5 + $0x110] sm:$0xff]
    %v206 = vld [vmem:[#allocation5 + $0x118] sm:$0xff]
    %v207 = vld [vmem:[#allocation5 + $0x120] sm:$0xff]
    %v208 = vld [vmem:[#allocation5 + $0x128] sm:$0xff]
    %v209 = vld [vmem:[#allocation5 + $0x130] sm:$0xff]
    %v210 = vld [vmem:[#allocation5 + $0x138] sm:$0xff]
    %v211 = vld [vmem:[#allocation5 + $0x140] sm:$0xff]
    %v212 = vld [vmem:[#allocation5 + $0x148] sm:$0xff]
    %v213 = vld [vmem:[#allocation5 + $0x150] sm:$0xff]
    %v214 = vld [vmem:[#allocation5 + $0x158] sm:$0xff]
    %v215 = vld [vmem:[#allocation5 + $0x160] sm:$0xff]
    %v216 = vld [vmem:[#allocation5 + $0x168] sm:$0xff]
    %v217 = vld [vmem:[#allocation5 + $0x170] sm:$0xff]
    %v218 = vld [vmem:[#allocation5 + $0x178] sm:$0xff]
    %v219 = vld [vmem:[#allocation5 + $0x180] sm:$0xff]
    %v220 = vld [vmem:[#allocation5 + $0x188] sm:$0xff]
    %v221 = vld [vmem:[#allocation5 + $0x190] sm:$0xff]
    %v222 = vld [vmem:[#allocation5 + $0x198] sm:$0xff]
    %v223 = vld [vmem:[#allocation5 + $0x1a0] sm:$0xff]
    %v224 = vld [vmem:[#allocation5 + $0x1a8] sm:$0xff]
    %v225 = vld [vmem:[#allocation5 + $0x1b0] sm:$0xff]
    %v226 = vld [vmem:[#allocation5 + $0x1b8] sm:$0xff]
    %v227 = vld [vmem:[#allocation5 + $0x1c0] sm:$0xff]
    %v228 = vld [vmem:[#allocation5 + $0x1c8] sm:$0xff]
    %v229 = vld [vmem:[#allocation5 + $0x1d0] sm:$0xff]
    %v230 = vld [vmem:[#allocation5 + $0x1d8] sm:$0xff]
    %v231 = vld [vmem:[#allocation5 + $0x1e0] sm:$0xff]
    %v232 = vld [vmem:[#allocation5 + $0x1e8] sm:$0xff]
    %v233 = vld [vmem:[#allocation5 + $0x1f0] sm:$0xff]
    %v234 = vld [vmem:[#allocation5 + $0x1f8] sm:$0xff]
    %v235 = vld [vmem:[#allocation5 + $0x200] sm:$0xff]
    %v236 = vld [vmem:[#allocation5 + $0x208] sm:$0xff]
    %v237 = vld [vmem:[#allocation5 + $0x210] sm:$0xff]
    %v238 = vld [vmem:[#allocation5 + $0x218] sm:$0xff]
    %v239 = vld [vmem:[#allocation5 + $0x220] sm:$0xff]
    %v240 = vld [vmem:[#allocation5 + $0x228] sm:$0xff]
    %v241 = vld [vmem:[#allocation5 + $0x230] sm:$0xff]
    %v242 = vld [vmem:[#allocation5 + $0x238] sm:$0xff]
    %v243 = vld [vmem:[#allocation5 + $0x240] sm:$0xff]
    %v244 = vld [vmem:[#allocation5 + $0x248] sm:$0xff]
    %v245 = vld [vmem:[#allocation5 + $0x250] sm:$0xff]
    %v246 = vld [vmem:[#allocation5 + $0x258] sm:$0xff]
    %v247 = vld [vmem:[#allocation5 + $0x260] sm:$0xff]
    %v248 = vld [vmem:[#allocation5 + $0x268] sm:$0xff]
    %v249 = vld [vmem:[#allocation5 + $0x270] sm:$0xff]
    %v250 = vld [vmem:[#allocation5 + $0x278] sm:$0xff]
    %v251 = vld [vmem:[#allocation5 + $0x280] sm:$0xff]
    %v252 = vld [vmem:[#allocation5 + $0x288] sm:$0xff]
    %v253 = vld [vmem:[#allocation5 + $0x290] sm:$0xff]
    %v254 = vld [vmem:[#allocation5 + $0x298] sm:$0xff]
    %v255 = vld [vmem:[#allocation5 + $0x2a0] sm:$0xff]
    %v256 = vld [vmem:[#allocation5 + $0x2a8] sm:$0xff]
    %v257 = vld [vmem:[#allocation5 + $0x2b0] sm:$0xff]
    %v258 = vld [vmem:[#allocation5 + $0x2b8] sm:$0xff]
    %v259 = vld [vmem:[#allocation5 + $0x2c0] sm:$0xff]
    %v260 = vld [vmem:[#allocation5 + $0x2c8] sm:$0xff]
    %v261 = vld [vmem:[#allocation5 + $0x2d0] sm:$0xff]
    %v262 = vld [vmem:[#allocation5 + $0x2d8] sm:$0xff]
    %v263 = vld [vmem:[#allocation5 + $0x2e0] sm:$0xff]
    %v264 = vld [vmem:[#allocation5 + $0x2e8] sm:$0xff]
    %v265 = vld [vmem:[#allocation5 + $0x2f0] sm:$0xff]
    %v266 = vld [vmem:[#allocation5 + $0x2f8] sm:$0xff]
    %v267 = vld [vmem:[#allocation5 + $0x300] sm:$0xff]
    %v268 = vld [vmem:[#allocation5 + $0x308] sm:$0xff]
    %v367 = vunpack.c.l.b16 %v171
    %v368 = vunpack.c.h.b16 %v171
    %v369 = vunpack.c.l.b16 %v172
    %v370 = vunpack.c.h.b16 %v172
    %v371 = vunpack.c.l.b16 %v173
    %v372 = vunpack.c.h.b16 %v173
    %v373 = vunpack.c.l.b16 %v174
    %v374 = vunpack.c.h.b16 %v174
    %v375 = vunpack.c.l.b16 %v175
    %v376 = vunpack.c.h.b16 %v175
    %v377 = vunpack.c.l.b16 %v176
    %v378 = vunpack.c.h.b16 %v176
    %v379 = vunpack.c.l.b16 %v177
    %v380 = vunpack.c.h.b16 %v177
    %v381 = vunpack.c.l.b16 %v178
    %v382 = vunpack.c.h.b16 %v178
    %v383 = vunpack.c.l.b16 %v179
    %v384 = vunpack.c.h.b16 %v179
    %v385 = vunpack.c.l.b16 %v180
    %v386 = vunpack.c.h.b16 %v180
    %v387 = vunpack.c.l.b16 %v181
    %v388 = vunpack.c.h.b16 %v181
    %v389 = vunpack.c.l.b16 %v182
    %v390 = vunpack.c.h.b16 %v182
    %v391 = vunpack.c.l.b16 %v183
    %v392 = vunpack.c.h.b16 %v183
    %v393 = vunpack.c.l.b16 %v184
    %v394 = vunpack.c.h.b16 %v184
    %v395 = vunpack.c.l.b16 %v185
    %v396 = vunpack.c.h.b16 %v185
    %v397 = vunpack.c.l.b16 %v186
    %v398 = vunpack.c.h.b16 %v186
    %v399 = vunpack.c.l.b16 %v187
    %v400 = vunpack.c.h.b16 %v187
    %v401 = vunpack.c.l.b16 %v188
    %v402 = vunpack.c.h.b16 %v188
    %v403 = vunpack.c.l.b16 %v189
    %v404 = vunpack.c.h.b16 %v189
    %v405 = vunpack.c.l.b16 %v190
    %v406 = vunpack.c.h.b16 %v190
    %v407 = vunpack.c.l.b16 %v191
    %v408 = vunpack.c.h.b16 %v191
    %v409 = vunpack.c.l.b16 %v192
    %v410 = vunpack.c.h.b16 %v192
    %v411 = vunpack.c.l.b16 %v193
    %v412 = vunpack.c.h.b16 %v193
    %v413 = vunpack.c.l.b16 %v194
    %v414 = vunpack.c.h.b16 %v194
    %v415 = vunpack.c.l.b16 %v195
    %v416 = vunpack.c.h.b16 %v195
    %v417 = vunpack.c.l.b16 %v196
    %v418 = vunpack.c.h.b16 %v196
    %v419 = vunpack.c.l.b16 %v197
    %v420 = vunpack.c.h.b16 %v197
    %v421 = vunpack.c.l.b16 %v198
    %v422 = vunpack.c.h.b16 %v198
    %v423 = vunpack.c.l.b16 %v199
    %v424 = vunpack.c.h.b16 %v199
    %v425 = vunpack.c.l.b16 %v200
    %v426 = vunpack.c.h.b16 %v200
    %v427 = vunpack.c.l.b16 %v201
    %v428 = vunpack.c.h.b16 %v201
    %v429 = vunpack.c.l.b16 %v202
    %v430 = vunpack.c.h.b16 %v202
    %v431 = vunpack.c.l.b16 %v203
    %v432 = vunpack.c.h.b16 %v203
    %v433 = vunpack.c.l.b16 %v204
    %v434 = vunpack.c.h.b16 %v204
    %v435 = vunpack.c.l.b16 %v205
    %v436 = vunpack.c.h.b16 %v205
    %v437 = vunpack.c.l.b16 %v206
    %v438 = vunpack.c.h.b16 %v206
    %v439 = vunpack.c.l.b16 %v207
    %v440 = vunpack.c.h.b16 %v207
    %v441 = vunpack.c.l.b16 %v208
    %v442 = vunpack.c.h.b16 %v208
    %v443 = vunpack.c.l.b16 %v209
    %v444 = vunpack.c.h.b16 %v209
    %v445 = vunpack.c.l.b16 %v210
    %v446 = vunpack.c.h.b16 %v210
    %v447 = vunpack.c.l.b16 %v211
    %v448 = vunpack.c.h.b16 %v211
    %v449 = vunpack.c.l.b16 %v212
    %v450 = vunpack.c.h.b16 %v212
    %v451 = vunpack.c.l.b16 %v213
    %v452 = vunpack.c.h.b16 %v213
    %v453 = vunpack.c.l.b16 %v214
    %v454 = vunpack.c.h.b16 %v214
    %v455 = vunpack.c.l.b16 %v215
    %v456 = vunpack.c.h.b16 %v215
    %v457 = vunpack.c.l.b16 %v216
    %v458 = vunpack.c.h.b16 %v216
    %v459 = vunpack.c.l.b16 %v217
    %v460 = vunpack.c.h.b16 %v217
    %v461 = vunpack.c.l.b16 %v218
    %v462 = vunpack.c.h.b16 %v218
    %v463 = vunpack.c.l.b16 %v219
    %v464 = vunpack.c.h.b16 %v219
    %v465 = vunpack.c.l.b16 %v220
    %v466 = vunpack.c.h.b16 %v220
    %v467 = vunpack.c.l.b16 %v221
    %v468 = vunpack.c.h.b16 %v221
    %v469 = vunpack.c.l.b16 %v222
    %v470 = vunpack.c.h.b16 %v222
    %v471 = vunpack.c.l.b16 %v223
    %v472 = vunpack.c.h.b16 %v223
    %v473 = vunpack.c.l.b16 %v224
    %v474 = vunpack.c.h.b16 %v224
    %v475 = vunpack.c.l.b16 %v225
    %v476 = vunpack.c.h.b16 %v225
    %v477 = vunpack.c.l.b16 %v226
    %v478 = vunpack.c.h.b16 %v226
    %v479 = vunpack.c.l.b16 %v227
    %v480 = vunpack.c.h.b16 %v227
    %v481 = vunpack.c.l.b16 %v228
    %v482 = vunpack.c.h.b16 %v228
    %v483 = vunpack.c.l.b16 %v229
    %v484 = vunpack.c.h.b16 %v229
    %v485 = vunpack.c.l.b16 %v230
    %v486 = vunpack.c.h.b16 %v230
    %v487 = vunpack.c.l.b16 %v231
    %v488 = vunpack.c.h.b16 %v231
    %v489 = vunpack.c.l.b16 %v232
    %v490 = vunpack.c.h.b16 %v232
    %v491 = vunpack.c.l.b16 %v233
    %v492 = vunpack.c.h.b16 %v233
    %v493 = vunpack.c.l.b16 %v234
    %v494 = vunpack.c.h.b16 %v234
    %v495 = vunpack.c.l.b16 %v235
    %v496 = vunpack.c.h.b16 %v235
    %v497 = vunpack.c.l.b16 %v236
    %v498 = vunpack.c.h.b16 %v236
    %v499 = vunpack.c.l.b16 %v237
    %v500 = vunpack.c.h.b16 %v237
    %v501 = vunpack.c.l.b16 %v238
    %v502 = vunpack.c.h.b16 %v238
    %v503 = vunpack.c.l.b16 %v239
    %v504 = vunpack.c.h.b16 %v239
    %v505 = vunpack.c.l.b16 %v240
    %v506 = vunpack.c.h.b16 %v240
    %v507 = vunpack.c.l.b16 %v241
    %v508 = vunpack.c.h.b16 %v241
    %v509 = vunpack.c.l.b16 %v242
    %v510 = vunpack.c.h.b16 %v242
    %v511 = vunpack.c.l.b16 %v243
    %v512 = vunpack.c.h.b16 %v243
    %v513 = vunpack.c.l.b16 %v244
    %v514 = vunpack.c.h.b16 %v244
    %v515 = vunpack.c.l.b16 %v245
    %v516 = vunpack.c.h.b16 %v245
    %v517 = vunpack.c.l.b16 %v246
    %v518 = vunpack.c.h.b16 %v246
    %v519 = vunpack.c.l.b16 %v247
    %v520 = vunpack.c.h.b16 %v247
    %v521 = vunpack.c.l.b16 %v248
    %v522 = vunpack.c.h.b16 %v248
    %v523 = vunpack.c.l.b16 %v249
    %v524 = vunpack.c.h.b16 %v249
    %v525 = vunpack.c.l.b16 %v250
    %v526 = vunpack.c.h.b16 %v250
    %v527 = vunpack.c.l.b16 %v251
    %v528 = vunpack.c.h.b16 %v251
    %v529 = vunpack.c.l.b16 %v252
    %v530 = vunpack.c.h.b16 %v252
    %v531 = vunpack.c.l.b16 %v253
    %v532 = vunpack.c.h.b16 %v253
    %v533 = vunpack.c.l.b16 %v254
    %v534 = vunpack.c.h.b16 %v254
    %v535 = vunpack.c.l.b16 %v255
    %v536 = vunpack.c.h.b16 %v255
    %v537 = vunpack.c.l.b16 %v256
    %v538 = vunpack.c.h.b16 %v256
    %v539 = vunpack.c.l.b16 %v257
    %v540 = vunpack.c.h.b16 %v257
    %v541 = vunpack.c.l.b16 %v258
    %v542 = vunpack.c.h.b16 %v258
    %v543 = vunpack.c.l.b16 %v259
    %v544 = vunpack.c.h.b16 %v259
    %v545 = vunpack.c.l.b16 %v260
    %v546 = vunpack.c.h.b16 %v260
    %v547 = vunpack.c.l.b16 %v261
    %v548 = vunpack.c.h.b16 %v261
    %v549 = vunpack.c.l.b16 %v262
    %v550 = vunpack.c.h.b16 %v262
    %v551 = vunpack.c.l.b16 %v263
    %v552 = vunpack.c.h.b16 %v263
    %v553 = vunpack.c.l.b16 %v264
    %v554 = vunpack.c.h.b16 %v264
    %v555 = vunpack.c.l.b16 %v265
    %v556 = vunpack.c.h.b16 %v265
    %v557 = vunpack.c.l.b16 %v266
    %v558 = vunpack.c.h.b16 %v266
    %v559 = vunpack.c.l.b16 %v267
    %v560 = vunpack.c.h.b16 %v267
    %v561 = vunpack.c.l.b16 %v268
    %v562 = vunpack.c.h.b16 %v268
    %v563 = vpack.c.b16 %v369, %v367
    %v564 = vpack.c.b16 %v370, %v368
    %v565 = vpack.c.b16 %v373, %v371
    %v566 = vpack.c.b16 %v374, %v372
    %v567 = vpack.c.b16 %v377, %v375
    %v568 = vpack.c.b16 %v378, %v376
    %v569 = vpack.c.b16 %v381, %v379
    %v570 = vpack.c.b16 %v382, %v380
    %v571 = vpack.c.b16 %v385, %v383
    %v572 = vpack.c.b16 %v386, %v384
    %v573 = vpack.c.b16 %v389, %v387
    %v574 = vpack.c.b16 %v390, %v388
    %v575 = vpack.c.b16 %v393, %v391
    %v576 = vpack.c.b16 %v394, %v392
    %v577 = vpack.c.b16 %v397, %v395
    %v578 = vpack.c.b16 %v398, %v396
    %v579 = vpack.c.b16 %v401, %v399
    %v580 = vpack.c.b16 %v402, %v400
    %v581 = vpack.c.b16 %v405, %v403
    %v582 = vpack.c.b16 %v406, %v404
    %v583 = vpack.c.b16 %v409, %v407
    %v584 = vpack.c.b16 %v410, %v408
    %v585 = vpack.c.b16 %v413, %v411
    %v586 = vpack.c.b16 %v414, %v412
    %v587 = vpack.c.b16 %v417, %v415
    %v588 = vpack.c.b16 %v418, %v416
    %v589 = vpack.c.b16 %v421, %v419
    %v590 = vpack.c.b16 %v422, %v420
    %v591 = vpack.c.b16 %v425, %v423
    %v592 = vpack.c.b16 %v426, %v424
    %v593 = vpack.c.b16 %v429, %v427
    %v594 = vpack.c.b16 %v430, %v428
    %v595 = vpack.c.b16 %v433, %v431
    %v596 = vpack.c.b16 %v434, %v432
    %v597 = vpack.c.b16 %v437, %v435
    %v598 = vpack.c.b16 %v438, %v436
    %v599 = vpack.c.b16 %v441, %v439
    %v600 = vpack.c.b16 %v442, %v440
    %v601 = vpack.c.b16 %v445, %v443
    %v602 = vpack.c.b16 %v446, %v444
    %v603 = vpack.c.b16 %v449, %v447
    %v604 = vpack.c.b16 %v450, %v448
    %v605 = vpack.c.b16 %v453, %v451
    %v606 = vpack.c.b16 %v454, %v452
    %v607 = vpack.c.b16 %v457, %v455
    %v608 = vpack.c.b16 %v458, %v456
    %v609 = vpack.c.b16 %v461, %v459
    %v610 = vpack.c.b16 %v462, %v460
    %v611 = vpack.c.b16 %v465, %v463
    %v612 = vpack.c.b16 %v466, %v464
    %v613 = vpack.c.b16 %v469, %v467
    %v614 = vpack.c.b16 %v470, %v468
    %v615 = vpack.c.b16 %v473, %v471
    %v616 = vpack.c.b16 %v474, %v472
    %v617 = vpack.c.b16 %v477, %v475
    %v618 = vpack.c.b16 %v478, %v476
    %v619 = vpack.c.b16 %v481, %v479
    %v620 = vpack.c.b16 %v482, %v480
    %v621 = vpack.c.b16 %v485, %v483
    %v622 = vpack.c.b16 %v486, %v484
    %v623 = vpack.c.b16 %v489, %v487
    %v624 = vpack.c.b16 %v490, %v488
    %v625 = vpack.c.b16 %v493, %v491
    %v626 = vpack.c.b16 %v494, %v492
    %v627 = vpack.c.b16 %v497, %v495
    %v628 = vpack.c.b16 %v498, %v496
    %v629 = vpack.c.b16 %v501, %v499
    %v630 = vpack.c.b16 %v502, %v500
    %v631 = vpack.c.b16 %v505, %v503
    %v632 = vpack.c.b16 %v506, %v504
    %v633 = vpack.c.b16 %v509, %v507
    %v634 = vpack.c.b16 %v510, %v508
    %v635 = vpack.c.b16 %v513, %v511
    %v636 = vpack.c.b16 %v514, %v512
    %v637 = vpack.c.b16 %v517, %v515
    %v638 = vpack.c.b16 %v518, %v516
    %v639 = vpack.c.b16 %v521, %v519
    %v640 = vpack.c.b16 %v522, %v520
    %v641 = vpack.c.b16 %v525, %v523
    %v642 = vpack.c.b16 %v526, %v524
    %v643 = vpack.c.b16 %v529, %v527
    %v644 = vpack.c.b16 %v530, %v528
    %v645 = vpack.c.b16 %v533, %v531
    %v646 = vpack.c.b16 %v534, %v532
    %v647 = vpack.c.b16 %v537, %v535
    %v648 = vpack.c.b16 %v538, %v536
    %v649 = vpack.c.b16 %v541, %v539
    %v650 = vpack.c.b16 %v542, %v540
    %v651 = vpack.c.b16 %v545, %v543
    %v652 = vpack.c.b16 %v546, %v544
    %v653 = vpack.c.b16 %v549, %v547
    %v654 = vpack.c.b16 %v550, %v548
    %v655 = vpack.c.b16 %v553, %v551
    %v656 = vpack.c.b16 %v554, %v552
    %v657 = vpack.c.b16 %v557, %v555
    %v658 = vpack.c.b16 %v558, %v556
    %v659 = vpack.c.b16 %v561, %v559
    %v660 = vpack.c.b16 %v562, %v560
    %vm759 = vcmask 130048
    %v761 = vsel %vm759, %v170, 0
    %763 = vmatprep.subr.bf16.mxu0 %v564
    %764 = vmatpush1.bf16.msra.mxu0 %v563
    %765 = vmatprep.subr.bf16.mxu0 %v566
    %766 = vmatpush1.bf16.msra.mxu0 %v565
    %767 = vmatprep.subr.bf16.mxu0 %v568
    %768 = vmatpush1.bf16.msra.mxu0 %v567
    %769 = vmatprep.subr.bf16.mxu0 %v570
    %770 = vmatpush1.bf16.msra.mxu0 %v569
    %771 = vmatprep.subr.bf16.mxu0 %v572
    %772 = vmatpush1.bf16.msra.mxu0 %v571
    %773 = vmatprep.subr.bf16.mxu0 %v574
    %774 = vmatpush1.bf16.msra.mxu0 %v573
    %775 = vmatprep.subr.bf16.mxu0 %v576
    %776 = vmatpush1.bf16.msra.mxu0 %v575
    %777 = vmatprep.subr.bf16.mxu0 %v578
    %778 = vmatpush1.bf16.msra.mxu0 %v577
    %779 = vmatprep.subr.bf16.mxu0 %v580
    %780 = vmatpush1.bf16.msra.mxu0 %v579
    %781 = vmatprep.subr.bf16.mxu0 %v582
    %782 = vmatpush1.bf16.msra.mxu0 %v581
    %783 = vmatprep.subr.bf16.mxu0 %v584
    %784 = vmatpush1.bf16.msra.mxu0 %v583
    %785 = vmatprep.subr.bf16.mxu0 %v586
    %786 = vmatpush1.bf16.msra.mxu0 %v585
    %787 = vmatprep.subr.bf16.mxu0 %v588
    %788 = vmatpush1.bf16.msra.mxu0 %v587
    %789 = vmatprep.subr.bf16.mxu0 %v590
    %790 = vmatpush1.bf16.msra.mxu0 %v589
    %791 = vmatprep.subr.bf16.mxu0 %v592
    %792 = vmatpush1.bf16.msra.mxu0 %v591
    %793 = vmatprep.subr.bf16.mxu0 %v594
    %794 = vmatpush1.bf16.msra.mxu0 %v593
    %795 = vmatprep.mubr.bf16.mxu0 %v165
    %796 = vmatmul.mubr.bf16.gmra.mrb[0].mxu0 %v164
    %v797 = vpop.f32.mrb[0].mxu0
    %v798 = vadd.f32 0.0, %v797
    %v799 = vpop.f32.mrb[0].mxu0
    %v800 = vadd.f32 0.0, %v799
    %v801 = vpop.f32.mrb[0].mxu0
    %v802 = vadd.f32 0.0, %v801
    %v803 = vpop.f32.mrb[0].mxu0
    %v804 = vadd.f32 0.0, %v803
    %805 = vdwg.mxu0
    %806 = vmatprep.subr.bf16.mxu0 %v596
    %807 = vmatpush1.bf16.msra.mxu0 %v595
    %808 = vmatprep.subr.bf16.mxu0 %v598
    %809 = vmatpush1.bf16.msra.mxu0 %v597
    %810 = vmatprep.subr.bf16.mxu0 %v600
    %811 = vmatpush1.bf16.msra.mxu0 %v599
    %812 = vmatprep.subr.bf16.mxu0 %v602
    %813 = vmatpush1.bf16.msra.mxu0 %v601
    %814 = vmatprep.subr.bf16.mxu0 %v604
    %815 = vmatpush1.bf16.msra.mxu0 %v603
    %816 = vmatprep.subr.bf16.mxu0 %v606
    %817 = vmatpush1.bf16.msra.mxu0 %v605
    %818 = vmatprep.subr.bf16.mxu0 %v608
    %819 = vmatpush1.bf16.msra.mxu0 %v607
    %820 = vmatprep.subr.bf16.mxu0 %v610
    %821 = vmatpush1.bf16.msra.mxu0 %v609
    %822 = vmatprep.subr.bf16.mxu0 %v612
    %823 = vmatpush1.bf16.msra.mxu0 %v611
    %824 = vmatprep.subr.bf16.mxu0 %v614
    %825 = vmatpush1.bf16.msra.mxu0 %v613
    %826 = vmatprep.subr.bf16.mxu0 %v616
    %827 = vmatpush1.bf16.msra.mxu0 %v615
    %828 = vmatprep.subr.bf16.mxu0 %v618
    %829 = vmatpush1.bf16.msra.mxu0 %v617
    %830 = vmatprep.subr.bf16.mxu0 %v620
    %831 = vmatpush1.bf16.msra.mxu0 %v619
    %832 = vmatprep.subr.bf16.mxu0 %v622
    %833 = vmatpush1.bf16.msra.mxu0 %v621
    %834 = vmatprep.subr.bf16.mxu0 %v624
    %835 = vmatpush1.bf16.msra.mxu0 %v623
    %836 = vmatprep.subr.bf16.mxu0 %v626
    %837 = vmatpush1.bf16.msra.mxu0 %v625
    %838 = vmatprep.mubr.bf16.mxu0 %v167
    %839 = vmatmul.mubr.bf16.gmra.mrb[0].mxu0 %v166
    %v840 = vpop.f32.mrb[0].mxu0
    %v841 = vadd.f32 %v798, %v840
    %v842 = vpop.f32.mrb[0].mxu0
    %v843 = vadd.f32 %v800, %v842
    %v844 = vpop.f32.mrb[0].mxu0
    %v845 = vadd.f32 %v802, %v844
    %v846 = vpop.f32.mrb[0].mxu0
    %v847 = vadd.f32 %v804, %v846
    %848 = vdwg.mxu0
    %849 = vmatprep.subr.bf16.mxu0 %v628
    %850 = vmatpush1.bf16.msra.mxu0 %v627
    %851 = vmatprep.subr.bf16.mxu0 %v630
    %852 = vmatpush1.bf16.msra.mxu0 %v629
    %853 = vmatprep.subr.bf16.mxu0 %v632
    %854 = vmatpush1.bf16.msra.mxu0 %v631
    %855 = vmatprep.subr.bf16.mxu0 %v634
    %856 = vmatpush1.bf16.msra.mxu0 %v633
    %857 = vmatprep.subr.bf16.mxu0 %v636
    %858 = vmatpush1.bf16.msra.mxu0 %v635
    %859 = vmatprep.subr.bf16.mxu0 %v638
    %860 = vmatpush1.bf16.msra.mxu0 %v637
    %861 = vmatprep.subr.bf16.mxu0 %v640
    %862 = vmatpush1.bf16.msra.mxu0 %v639
    %863 = vmatprep.subr.bf16.mxu0 %v642
    %864 = vmatpush1.bf16.msra.mxu0 %v641
    %865 = vmatprep.subr.bf16.mxu0 %v644
    %866 = vmatpush1.bf16.msra.mxu0 %v643
    %867 = vmatprep.subr.bf16.mxu0 %v646
    %868 = vmatpush1.bf16.msra.mxu0 %v645
    %869 = vmatprep.subr.bf16.mxu0 %v648
    %870 = vmatpush1.bf16.msra.mxu0 %v647
    %871 = vmatprep.subr.bf16.mxu0 %v650
    %872 = vmatpush1.bf16.msra.mxu0 %v649
    %873 = vmatprep.subr.bf16.mxu0 %v652
    %874 = vmatpush1.bf16.msra.mxu0 %v651
    %875 = vmatprep.subr.bf16.mxu0 %v654
    %876 = vmatpush1.bf16.msra.mxu0 %v653
    %877 = vmatprep.subr.bf16.mxu0 %v656
    %878 = vmatpush1.bf16.msra.mxu0 %v655
    %879 = vmatprep.subr.bf16.mxu0 %v658
    %880 = vmatpush1.bf16.msra.mxu0 %v657
    %881 = vmatprep.mubr.bf16.mxu0 %v169
    %882 = vmatmul.mubr.bf16.gmra.mrb[0].mxu0 %v168
    %v883 = vpop.f32.mrb[0].mxu0
    %v884 = vadd.f32 %v841, %v883
    %v885 = vpop.f32.mrb[0].mxu0
    %v886 = vadd.f32 %v843, %v885
    %v887 = vpop.f32.mrb[0].mxu0
    %v888 = vadd.f32 %v845, %v887
    %v889 = vpop.f32.mrb[0].mxu0
    %v890 = vadd.f32 %v847, %v889
    %891 = vdwg.mxu0
    %892 = vmatprep.subr.bf16.mxu0 %v660
    %893 = vmatpush1.bf16.msra.mxu0 %v659
    %894 = vmatprep.subr.bf16.mxu0 0
    %895 = vmatpush1.bf16.msra.mxu0 0
    %896 = vmatprep.subr.bf16.mxu0 0
    %897 = vmatpush1.bf16.msra.mxu0 0
    %898 = vmatprep.subr.bf16.mxu0 0
    %899 = vmatpush1.bf16.msra.mxu0 0
    %900 = vmatprep.subr.bf16.mxu0 0
    %901 = vmatpush1.bf16.msra.mxu0 0
    %902 = vmatprep.subr.bf16.mxu0 0
    %903 = vmatpush1.bf16.msra.mxu0 0
    %904 = vmatprep.subr.bf16.mxu0 0
    %905 = vmatpush1.bf16.msra.mxu0 0
    %906 = vmatprep.subr.bf16.mxu0 0
    %907 = vmatpush1.bf16.msra.mxu0 0
    %908 = vmatprep.subr.bf16.mxu0 0
    %909 = vmatpush1.bf16.msra.mxu0 0
    %910 = vmatprep.subr.bf16.mxu0 0
    %911 = vmatpush1.bf16.msra.mxu0 0
    %912 = vmatprep.subr.bf16.mxu0 0
    %913 = vmatpush1.bf16.msra.mxu0 0
    %914 = vmatprep.subr.bf16.mxu0 0
    %915 = vmatpush1.bf16.msra.mxu0 0
    %916 = vmatprep.subr.bf16.mxu0 0
    %917 = vmatpush1.bf16.msra.mxu0 0
    %918 = vmatprep.subr.bf16.mxu0 0
    %919 = vmatpush1.bf16.msra.mxu0 0
    %920 = vmatprep.subr.bf16.mxu0 0
    %921 = vmatpush1.bf16.msra.mxu0 0
    %922 = vmatprep.subr.bf16.mxu0 0
    %923 = vmatpush1.bf16.msra.mxu0 0
    %924 = vmatprep.mubr.bf16.mxu0 0
    %925 = vmatmul.mubr.bf16.gmra.mrb[0].mxu0 %v761
    %v926 = vpop.f32.mrb[0].mxu0
    %v927 = vadd.f32 %v884, %v926
    %v928 = vpop.f32.mrb[0].mxu0
    %v929 = vadd.f32 %v886, %v928
    %v930 = vpop.f32.mrb[0].mxu0
    %v931 = vadd.f32 %v888, %v930
    %v932 = vpop.f32.mrb[0].mxu0
    %v933 = vadd.f32 %v890, %v932
    %934 = vdwg.mxu0
    %v935 = vld [vmem:[%s6] sm:$0xf]
    %v937 = vlaneseq
    %v938 = vshrl.u32 %v937, 7
    %v939 = vsub.s32 0, %v938
    %v940 = vrot.slane %v935, %v939
    %v941 = vlaneseq
    %v942 = vshrl.u32 %v941, 7
    %v943 = vsub.s32 2, %v942
    %v944 = vrot.slane %v935, %v943
    %v947 = vlaneseq
    %v948 = vshrl.u32 %v947, 7
    %v949 = vsub.s32 0, %v948
    %v950 = vrot.slane %v940, %v949
    %v951 = vlaneseq
    %v952 = vshrl.u32 %v951, 7
    %v953 = vsub.s32 0, %v952
    %v954 = vrot.slane %v944, %v953
    %v955 = vmul.f32 %v927, %v950
    %v956 = vmul.f32 %v929, %v954
    %v957 = vmul.f32 %v931, %v950
    %v958 = vmul.f32 %v933, %v954
    %v959 = vlaneseq
    %v960 = vshrl.u32 %v959, 7
    %v961 = vsub.s32 1, %v960
    %v962 = vrot.slane %v935, %v961
    %v963 = vlaneseq
    %v964 = vshrl.u32 %v963, 7
    %v965 = vsub.s32 3, %v964
    %v966 = vrot.slane %v935, %v965
    %v969 = vlaneseq
    %v970 = vshrl.u32 %v969, 7
    %v971 = vsub.s32 1, %v970
    %v972 = vrot.slane %v962, %v971
    %v973 = vlaneseq
    %v974 = vshrl.u32 %v973, 7
    %v975 = vsub.s32 1, %v974
    %v976 = vrot.slane %v966, %v975
    %v977 = vadd.f32 %v955, %v972
    %v978 = vadd.f32 %v956, %v976
    %v979 = vadd.f32 %v957, %v972
    %v980 = vadd.f32 %v958, %v976
    %vm981 = vcmp.ge.f32.partialorder %v977, 0.0
    %vm982 = vcmp.ge.f32.partialorder %v978, 0.0
    %vm983 = vcmp.ge.f32.partialorder %v979, 0.0
    %vm984 = vcmp.ge.f32.partialorder %v980, 0.0
    %v985 = vsel %vm981, 1.0, -1.0
    %v986 = vsel %vm982, 1.0, -1.0
    %v987 = vsel %vm983, 1.0, -1.0
    %v988 = vsel %vm984, 1.0, -1.0
    %v989 = vpack.c.bf16 %v987, %v985
    %v990 = vpack.c.bf16 %v988, %v986
    %v991 = vld [vmem:[#allocation7] sm:$0xff]
    %v992 = vld [vmem:[#allocation7 + $0x8] sm:$0xff]
    %v993 = vld [vmem:[#allocation7 + $0x10] sm:$0xff]
    %v994 = vld [vmem:[#allocation7 + $0x18] sm:$0xff]
    %v995 = vld [vmem:[#allocation7 + $0x20] sm:$0xff]
    %v996 = vld [vmem:[#allocation7 + $0x28] sm:$0xff]
    %v997 = vld [vmem:[#allocation7 + $0x30] sm:$0xff]
    %v998 = vld [vmem:[#allocation7 + $0x38] sm:$0xff]
    %v999 = vld [vmem:[#allocation7 + $0x40] sm:$0xff]
    %v1000 = vld [vmem:[#allocation7 + $0x48] sm:$0xff]
    %v1001 = vld [vmem:[#allocation7 + $0x50] sm:$0xff]
    %v1002 = vld [vmem:[#allocation7 + $0x58] sm:$0xff]
    %v1003 = vld [vmem:[#allocation7 + $0x60] sm:$0xff]
    %v1004 = vld [vmem:[#allocation7 + $0x68] sm:$0xff]
    %v1005 = vld [vmem:[#allocation7 + $0x70] sm:$0xff]
    %v1006 = vld [vmem:[#allocation7 + $0x78] sm:$0xff]
    %v1007 = vld [vmem:[#allocation7 + $0x80] sm:$0xff]
    %v1008 = vld [vmem:[#allocation7 + $0x88] sm:$0xff]
    %v1009 = vld [vmem:[#allocation7 + $0x90] sm:$0xff]
    %v1010 = vld [vmem:[#allocation7 + $0x98] sm:$0xff]
    %v1011 = vld [vmem:[#allocation7 + $0xa0] sm:$0xff]
    %v1012 = vld [vmem:[#allocation7 + $0xa8] sm:$0xff]
    %v1013 = vld [vmem:[#allocation7 + $0xb0] sm:$0xff]
    %v1014 = vld [vmem:[#allocation7 + $0xb8] sm:$0xff]
    %v1015 = vld [vmem:[#allocation7 + $0xc0] sm:$0xff]
    %v1016 = vld [vmem:[#allocation7 + $0xc8] sm:$0xff]
    %v1017 = vld [vmem:[#allocation7 + $0xd0] sm:$0xff]
    %v1018 = vld [vmem:[#allocation7 + $0xd8] sm:$0xff]
    %v1019 = vld [vmem:[#allocation7 + $0xe0] sm:$0xff]
    %v1020 = vld [vmem:[#allocation7 + $0xe8] sm:$0xff]
    %v1021 = vld [vmem:[#allocation7 + $0xf0] sm:$0xff]
    %v1022 = vld [vmem:[#allocation7 + $0xf8] sm:$0xff]
    %v1055 = vunpack.c.l.b16 %v991
    %v1056 = vunpack.c.h.b16 %v991
    %v1057 = vunpack.c.l.b16 %v992
    %v1058 = vunpack.c.h.b16 %v992
    %v1059 = vunpack.c.l.b16 %v993
    %v1060 = vunpack.c.h.b16 %v993
    %v1061 = vunpack.c.l.b16 %v994
    %v1062 = vunpack.c.h.b16 %v994
    %v1063 = vunpack.c.l.b16 %v995
    %v1064 = vunpack.c.h.b16 %v995
    %v1065 = vunpack.c.l.b16 %v996
    %v1066 = vunpack.c.h.b16 %v996
    %v1067 = vunpack.c.l.b16 %v997
    %v1068 = vunpack.c.h.b16 %v997
    %v1069 = vunpack.c.l.b16 %v998
    %v1070 = vunpack.c.h.b16 %v998
    %v1071 = vunpack.c.l.b16 %v999
    %v1072 = vunpack.c.h.b16 %v999
    %v1073 = vunpack.c.l.b16 %v1000
    %v1074 = vunpack.c.h.b16 %v1000
    %v1075 = vunpack.c.l.b16 %v1001
    %v1076 = vunpack.c.h.b16 %v1001
    %v1077 = vunpack.c.l.b16 %v1002
    %v1078 = vunpack.c.h.b16 %v1002
    %v1079 = vunpack.c.l.b16 %v1003
    %v1080 = vunpack.c.h.b16 %v1003
    %v1081 = vunpack.c.l.b16 %v1004
    %v1082 = vunpack.c.h.b16 %v1004
    %v1083 = vunpack.c.l.b16 %v1005
    %v1084 = vunpack.c.h.b16 %v1005
    %v1085 = vunpack.c.l.b16 %v1006
    %v1086 = vunpack.c.h.b16 %v1006
    %v1087 = vunpack.c.l.b16 %v1007
    %v1088 = vunpack.c.h.b16 %v1007
    %v1089 = vunpack.c.l.b16 %v1008
    %v1090 = vunpack.c.h.b16 %v1008
    %v1091 = vunpack.c.l.b16 %v1009
    %v1092 = vunpack.c.h.b16 %v1009
    %v1093 = vunpack.c.l.b16 %v1010
    %v1094 = vunpack.c.h.b16 %v1010
    %v1095 = vunpack.c.l.b16 %v1011
    %v1096 = vunpack.c.h.b16 %v1011
    %v1097 = vunpack.c.l.b16 %v1012
    %v1098 = vunpack.c.h.b16 %v1012
    %v1099 = vunpack.c.l.b16 %v1013
    %v1100 = vunpack.c.h.b16 %v1013
    %v1101 = vunpack.c.l.b16 %v1014
    %v1102 = vunpack.c.h.b16 %v1014
    %v1103 = vunpack.c.l.b16 %v1015
    %v1104 = vunpack.c.h.b16 %v1015
    %v1105 = vunpack.c.l.b16 %v1016
    %v1106 = vunpack.c.h.b16 %v1016
    %v1107 = vunpack.c.l.b16 %v1017
    %v1108 = vunpack.c.h.b16 %v1017
    %v1109 = vunpack.c.l.b16 %v1018
    %v1110 = vunpack.c.h.b16 %v1018
    %v1111 = vunpack.c.l.b16 %v1019
    %v1112 = vunpack.c.h.b16 %v1019
    %v1113 = vunpack.c.l.b16 %v1020
    %v1114 = vunpack.c.h.b16 %v1020
    %v1115 = vunpack.c.l.b16 %v1021
    %v1116 = vunpack.c.h.b16 %v1021
    %v1117 = vunpack.c.l.b16 %v1022
    %v1118 = vunpack.c.h.b16 %v1022
    %v1119 = vpack.c.b16 %v1057, %v1055
    %v1120 = vpack.c.b16 %v1058, %v1056
    %v1121 = vpack.c.b16 %v1061, %v1059
    %v1122 = vpack.c.b16 %v1062, %v1060
    %v1123 = vpack.c.b16 %v1065, %v1063
    %v1124 = vpack.c.b16 %v1066, %v1064
    %v1125 = vpack.c.b16 %v1069, %v1067
    %v1126 = vpack.c.b16 %v1070, %v1068
    %v1127 = vpack.c.b16 %v1073, %v1071
    %v1128 = vpack.c.b16 %v1074, %v1072
    %v1129 = vpack.c.b16 %v1077, %v1075
    %v1130 = vpack.c.b16 %v1078, %v1076
    %v1131 = vpack.c.b16 %v1081, %v1079
    %v1132 = vpack.c.b16 %v1082, %v1080
    %v1133 = vpack.c.b16 %v1085, %v1083
    %v1134 = vpack.c.b16 %v1086, %v1084
    %v1135 = vpack.c.b16 %v1089, %v1087
    %v1136 = vpack.c.b16 %v1090, %v1088
    %v1137 = vpack.c.b16 %v1093, %v1091
    %v1138 = vpack.c.b16 %v1094, %v1092
    %v1139 = vpack.c.b16 %v1097, %v1095
    %v1140 = vpack.c.b16 %v1098, %v1096
    %v1141 = vpack.c.b16 %v1101, %v1099
    %v1142 = vpack.c.b16 %v1102, %v1100
    %v1143 = vpack.c.b16 %v1105, %v1103
    %v1144 = vpack.c.b16 %v1106, %v1104
    %v1145 = vpack.c.b16 %v1109, %v1107
    %v1146 = vpack.c.b16 %v1110, %v1108
    %v1147 = vpack.c.b16 %v1113, %v1111
    %v1148 = vpack.c.b16 %v1114, %v1112
    %v1149 = vpack.c.b16 %v1117, %v1115
    %v1150 = vpack.c.b16 %v1118, %v1116
    %1183 = vmatprep.subr.bf16.mxu0 %v1120
    %1184 = vmatpush1.bf16.msra.mxu0 %v1119
    %1185 = vmatprep.subr.bf16.mxu0 %v1122
    %1186 = vmatpush1.bf16.msra.mxu0 %v1121
    %1187 = vmatprep.subr.bf16.mxu0 %v1124
    %1188 = vmatpush1.bf16.msra.mxu0 %v1123
    %1189 = vmatprep.subr.bf16.mxu0 %v1126
    %1190 = vmatpush1.bf16.msra.mxu0 %v1125
    %1191 = vmatprep.subr.bf16.mxu0 %v1128
    %1192 = vmatpush1.bf16.msra.mxu0 %v1127
    %1193 = vmatprep.subr.bf16.mxu0 %v1130
    %1194 = vmatpush1.bf16.msra.mxu0 %v1129
    %1195 = vmatprep.subr.bf16.mxu0 %v1132
    %1196 = vmatpush1.bf16.msra.mxu0 %v1131
    %1197 = vmatprep.subr.bf16.mxu0 %v1134
    %1198 = vmatpush1.bf16.msra.mxu0 %v1133
    %1199 = vmatprep.subr.bf16.mxu0 %v1136
    %1200 = vmatpush1.bf16.msra.mxu0 %v1135
    %1201 = vmatprep.subr.bf16.mxu0 %v1138
    %1202 = vmatpush1.bf16.msra.mxu0 %v1137
    %1203 = vmatprep.subr.bf16.mxu0 %v1140
    %1204 = vmatpush1.bf16.msra.mxu0 %v1139
    %1205 = vmatprep.subr.bf16.mxu0 %v1142
    %1206 = vmatpush1.bf16.msra.mxu0 %v1141
    %1207 = vmatprep.subr.bf16.mxu0 %v1144
    %1208 = vmatpush1.bf16.msra.mxu0 %v1143
    %1209 = vmatprep.subr.bf16.mxu0 %v1146
    %1210 = vmatpush1.bf16.msra.mxu0 %v1145
    %1211 = vmatprep.subr.bf16.mxu0 %v1148
    %1212 = vmatpush1.bf16.msra.mxu0 %v1147
    %1213 = vmatprep.subr.bf16.mxu0 %v1150
    %1214 = vmatpush1.bf16.msra.mxu0 %v1149
    %1215 = vmatprep.mubr.bf16.mxu0 %v990
    %1216 = vmatmul.mubr.bf16.gmra.mrb[0].mxu0 %v989
    %v1217 = vpop.f32.mrb[0].mxu0
    %v1218 = vadd.f32 0.0, %v1217
    %v1219 = vpop.f32.mrb[0].mxu0
    %v1220 = vadd.f32 0.0, %v1219
    %v1221 = vpop.f32.mrb[0].mxu0
    %v1222 = vadd.f32 0.0, %v1221
    %v1223 = vpop.f32.mrb[0].mxu0
    %v1224 = vadd.f32 0.0, %v1223
    %1225 = vdwg.mxu0
    %v1226 = vld [vmem:[%s7] sm:$0xf]
    %v1228 = vlaneseq
    %v1229 = vshrl.u32 %v1228, 7
    %v1230 = vsub.s32 0, %v1229
    %v1231 = vrot.slane %v1226, %v1230
    %v1232 = vlaneseq
    %v1233 = vshrl.u32 %v1232, 7
    %v1234 = vsub.s32 2, %v1233
    %v1235 = vrot.slane %v1226, %v1234
    %v1238 = vlaneseq
    %v1239 = vshrl.u32 %v1238, 7
    %v1240 = vsub.s32 0, %v1239
    %v1241 = vrot.slane %v1231, %v1240
    %v1242 = vlaneseq
    %v1243 = vshrl.u32 %v1242, 7
    %v1244 = vsub.s32 0, %v1243
    %v1245 = vrot.slane %v1235, %v1244
    %v1246 = vmul.f32 %v1218, %v1241
    %v1247 = vmul.f32 %v1220, %v1245
    %v1248 = vmul.f32 %v1222, %v1241
    %v1249 = vmul.f32 %v1224, %v1245
    %v1250 = vlaneseq
    %v1251 = vshrl.u32 %v1250, 7
    %v1252 = vsub.s32 1, %v1251
    %v1253 = vrot.slane %v1226, %v1252
    %v1254 = vlaneseq
    %v1255 = vshrl.u32 %v1254, 7
    %v1256 = vsub.s32 3, %v1255
    %v1257 = vrot.slane %v1226, %v1256
    %v1260 = vlaneseq
    %v1261 = vshrl.u32 %v1260, 7
    %v1262 = vsub.s32 1, %v1261
    %v1263 = vrot.slane %v1253, %v1262
    %v1264 = vlaneseq
    %v1265 = vshrl.u32 %v1264, 7
    %v1266 = vsub.s32 1, %v1265
    %v1267 = vrot.slane %v1257, %v1266
    %v1268 = vadd.f32 %v1246, %v1263
    %v1269 = vadd.f32 %v1247, %v1267
    %v1270 = vadd.f32 %v1248, %v1263
    %v1271 = vadd.f32 %v1249, %v1267
    %vm1272 = vcmp.ge.f32.partialorder %v1268, 0.0
    %vm1273 = vcmp.ge.f32.partialorder %v1269, 0.0
    %vm1274 = vcmp.ge.f32.partialorder %v1270, 0.0
    %vm1275 = vcmp.ge.f32.partialorder %v1271, 0.0
    %v1276 = vsel %vm1272, 1.0, -1.0
    %v1277 = vsel %vm1273, 1.0, -1.0
    %v1278 = vsel %vm1274, 1.0, -1.0
    %v1279 = vsel %vm1275, 1.0, -1.0
    %v1280 = vpack.c.bf16 %v1278, %v1276
    %v1281 = vpack.c.bf16 %v1279, %v1277
    %v1282 = vld [vmem:[#allocation8] sm:$0xff]
    %v1283 = vld [vmem:[#allocation8 + $0x8] sm:$0xff]
    %v1284 = vld [vmem:[#allocation8 + $0x10] sm:$0xff]
    %v1285 = vld [vmem:[#allocation8 + $0x18] sm:$0xff]
    %v1286 = vld [vmem:[#allocation8 + $0x20] sm:$0xff]
    %v1287 = vld [vmem:[#allocation8 + $0x28] sm:$0xff]
    %v1288 = vld [vmem:[#allocation8 + $0x30] sm:$0xff]
    %v1289 = vld [vmem:[#allocation8 + $0x38] sm:$0xff]
    %v1290 = vld [vmem:[#allocation8 + $0x40] sm:$0xff]
    %v1291 = vld [vmem:[#allocation8 + $0x48] sm:$0xff]
    %v1292 = vld [vmem:[#allocation8 + $0x50] sm:$0xff]
    %v1293 = vld [vmem:[#allocation8 + $0x58] sm:$0xff]
    %v1294 = vld [vmem:[#allocation8 + $0x60] sm:$0xff]
    %v1295 = vld [vmem:[#allocation8 + $0x68] sm:$0xff]
    %v1296 = vld [vmem:[#allocation8 + $0x70] sm:$0xff]
    %v1297 = vld [vmem:[#allocation8 + $0x78] sm:$0xff]
    %v1298 = vld [vmem:[#allocation8 + $0x80] sm:$0xff]
    %v1299 = vld [vmem:[#allocation8 + $0x88] sm:$0xff]
    %v1300 = vld [vmem:[#allocation8 + $0x90] sm:$0xff]
    %v1301 = vld [vmem:[#allocation8 + $0x98] sm:$0xff]
    %v1302 = vld [vmem:[#allocation8 + $0xa0] sm:$0xff]
    %v1303 = vld [vmem:[#allocation8 + $0xa8] sm:$0xff]
    %v1304 = vld [vmem:[#allocation8 + $0xb0] sm:$0xff]
    %v1305 = vld [vmem:[#allocation8 + $0xb8] sm:$0xff]
    %v1306 = vld [vmem:[#allocation8 + $0xc0] sm:$0xff]
    %v1307 = vld [vmem:[#allocation8 + $0xc8] sm:$0xff]
    %v1308 = vld [vmem:[#allocation8 + $0xd0] sm:$0xff]
    %v1309 = vld [vmem:[#allocation8 + $0xd8] sm:$0xff]
    %v1310 = vld [vmem:[#allocation8 + $0xe0] sm:$0xff]
    %v1311 = vld [vmem:[#allocation8 + $0xe8] sm:$0xff]
    %v1312 = vld [vmem:[#allocation8 + $0xf0] sm:$0xff]
    %v1313 = vld [vmem:[#allocation8 + $0xf8] sm:$0xff]
    %v1346 = vunpack.c.l.b16 %v1282
    %v1347 = vunpack.c.h.b16 %v1282
    %v1348 = vunpack.c.l.b16 %v1283
    %v1349 = vunpack.c.h.b16 %v1283
    %v1350 = vunpack.c.l.b16 %v1284
    %v1351 = vunpack.c.h.b16 %v1284
    %v1352 = vunpack.c.l.b16 %v1285
    %v1353 = vunpack.c.h.b16 %v1285
    %v1354 = vunpack.c.l.b16 %v1286
    %v1355 = vunpack.c.h.b16 %v1286
    %v1356 = vunpack.c.l.b16 %v1287
    %v1357 = vunpack.c.h.b16 %v1287
    %v1358 = vunpack.c.l.b16 %v1288
    %v1359 = vunpack.c.h.b16 %v1288
    %v1360 = vunpack.c.l.b16 %v1289
    %v1361 = vunpack.c.h.b16 %v1289
    %v1362 = vunpack.c.l.b16 %v1290
    %v1363 = vunpack.c.h.b16 %v1290
    %v1364 = vunpack.c.l.b16 %v1291
    %v1365 = vunpack.c.h.b16 %v1291
    %v1366 = vunpack.c.l.b16 %v1292
    %v1367 = vunpack.c.h.b16 %v1292
    %v1368 = vunpack.c.l.b16 %v1293
    %v1369 = vunpack.c.h.b16 %v1293
    %v1370 = vunpack.c.l.b16 %v1294
    %v1371 = vunpack.c.h.b16 %v1294
    %v1372 = vunpack.c.l.b16 %v1295
    %v1373 = vunpack.c.h.b16 %v1295
    %v1374 = vunpack.c.l.b16 %v1296
    %v1375 = vunpack.c.h.b16 %v1296
    %v1376 = vunpack.c.l.b16 %v1297
    %v1377 = vunpack.c.h.b16 %v1297
    %v1378 = vunpack.c.l.b16 %v1298
    %v1379 = vunpack.c.h.b16 %v1298
    %v1380 = vunpack.c.l.b16 %v1299
    %v1381 = vunpack.c.h.b16 %v1299
    %v1382 = vunpack.c.l.b16 %v1300
    %v1383 = vunpack.c.h.b16 %v1300
    %v1384 = vunpack.c.l.b16 %v1301
    %v1385 = vunpack.c.h.b16 %v1301
    %v1386 = vunpack.c.l.b16 %v1302
    %v1387 = vunpack.c.h.b16 %v1302
    %v1388 = vunpack.c.l.b16 %v1303
    %v1389 = vunpack.c.h.b16 %v1303
    %v1390 = vunpack.c.l.b16 %v1304
    %v1391 = vunpack.c.h.b16 %v1304
    %v1392 = vunpack.c.l.b16 %v1305
    %v1393 = vunpack.c.h.b16 %v1305
    %v1394 = vunpack.c.l.b16 %v1306
    %v1395 = vunpack.c.h.b16 %v1306
    %v1396 = vunpack.c.l.b16 %v1307
    %v1397 = vunpack.c.h.b16 %v1307
    %v1398 = vunpack.c.l.b16 %v1308
    %v1399 = vunpack.c.h.b16 %v1308
    %v1400 = vunpack.c.l.b16 %v1309
    %v1401 = vunpack.c.h.b16 %v1309
    %v1402 = vunpack.c.l.b16 %v1310
    %v1403 = vunpack.c.h.b16 %v1310
    %v1404 = vunpack.c.l.b16 %v1311
    %v1405 = vunpack.c.h.b16 %v1311
    %v1406 = vunpack.c.l.b16 %v1312
    %v1407 = vunpack.c.h.b16 %v1312
    %v1408 = vunpack.c.l.b16 %v1313
    %v1409 = vunpack.c.h.b16 %v1313
    %v1410 = vpack.c.b16 %v1348, %v1346
    %v1411 = vpack.c.b16 %v1349, %v1347
    %v1412 = vpack.c.b16 %v1352, %v1350
    %v1413 = vpack.c.b16 %v1353, %v1351
    %v1414 = vpack.c.b16 %v1356, %v1354
    %v1415 = vpack.c.b16 %v1357, %v1355
    %v1416 = vpack.c.b16 %v1360, %v1358
    %v1417 = vpack.c.b16 %v1361, %v1359
    %v1418 = vpack.c.b16 %v1364, %v1362
    %v1419 = vpack.c.b16 %v1365, %v1363
    %v1420 = vpack.c.b16 %v1368, %v1366
    %v1421 = vpack.c.b16 %v1369, %v1367
    %v1422 = vpack.c.b16 %v1372, %v1370
    %v1423 = vpack.c.b16 %v1373, %v1371
    %v1424 = vpack.c.b16 %v1376, %v1374
    %v1425 = vpack.c.b16 %v1377, %v1375
    %v1426 = vpack.c.b16 %v1380, %v1378
    %v1427 = vpack.c.b16 %v1381, %v1379
    %v1428 = vpack.c.b16 %v1384, %v1382
    %v1429 = vpack.c.b16 %v1385, %v1383
    %v1430 = vpack.c.b16 %v1388, %v1386
    %v1431 = vpack.c.b16 %v1389, %v1387
    %v1432 = vpack.c.b16 %v1392, %v1390
    %v1433 = vpack.c.b16 %v1393, %v1391
    %v1434 = vpack.c.b16 %v1396, %v1394
    %v1435 = vpack.c.b16 %v1397, %v1395
    %v1436 = vpack.c.b16 %v1400, %v1398
    %v1437 = vpack.c.b16 %v1401, %v1399
    %v1438 = vpack.c.b16 %v1404, %v1402
    %v1439 = vpack.c.b16 %v1405, %v1403
    %v1440 = vpack.c.b16 %v1408, %v1406
    %v1441 = vpack.c.b16 %v1409, %v1407
    %1474 = vmatprep.subr.bf16.mxu0 %v1411
    %1475 = vmatpush1.bf16.msra.mxu0 %v1410
    %1476 = vmatprep.subr.bf16.mxu0 %v1413
    %1477 = vmatpush1.bf16.msra.mxu0 %v1412
    %1478 = vmatprep.subr.bf16.mxu0 %v1415
    %1479 = vmatpush1.bf16.msra.mxu0 %v1414
    %1480 = vmatprep.subr.bf16.mxu0 %v1417
    %1481 = vmatpush1.bf16.msra.mxu0 %v1416
    %1482 = vmatprep.subr.bf16.mxu0 %v1419
    %1483 = vmatpush1.bf16.msra.mxu0 %v1418
    %1484 = vmatprep.subr.bf16.mxu0 %v1421
    %1485 = vmatpush1.bf16.msra.mxu0 %v1420
    %1486 = vmatprep.subr.bf16.mxu0 %v1423
    %1487 = vmatpush1.bf16.msra.mxu0 %v1422
    %1488 = vmatprep.subr.bf16.mxu0 %v1425
    %1489 = vmatpush1.bf16.msra.mxu0 %v1424
    %1490 = vmatprep.subr.bf16.mxu0 %v1427
    %1491 = vmatpush1.bf16.msra.mxu0 %v1426
    %1492 = vmatprep.subr.bf16.mxu0 %v1429
    %1493 = vmatpush1.bf16.msra.mxu0 %v1428
    %1494 = vmatprep.subr.bf16.mxu0 %v1431
    %1495 = vmatpush1.bf16.msra.mxu0 %v1430
    %1496 = vmatprep.subr.bf16.mxu0 %v1433
    %1497 = vmatpush1.bf16.msra.mxu0 %v1432
    %1498 = vmatprep.subr.bf16.mxu0 %v1435
    %1499 = vmatpush1.bf16.msra.mxu0 %v1434
    %1500 = vmatprep.subr.bf16.mxu0 %v1437
    %1501 = vmatpush1.bf16.msra.mxu0 %v1436
    %1502 = vmatprep.subr.bf16.mxu0 %v1439
    %1503 = vmatpush1.bf16.msra.mxu0 %v1438
    %1504 = vmatprep.subr.bf16.mxu0 %v1441
    %1505 = vmatpush1.bf16.msra.mxu0 %v1440
    %1506 = vmatprep.mubr.bf16.mxu0 %v1281
    %1507 = vmatmul.mubr.bf16.gmra.mrb[0].mxu0 %v1280
    %v1508 = vpop.f32.mrb[0].mxu0
    %v1509 = vadd.f32 0.0, %v1508
    %v1510 = vpop.f32.mrb[0].mxu0
    %v1511 = vadd.f32 0.0, %v1510
    %v1512 = vpop.f32.mrb[0].mxu0
    %v1513 = vadd.f32 0.0, %v1512
    %v1514 = vpop.f32.mrb[0].mxu0
    %v1515 = vadd.f32 0.0, %v1514
    %1516 = vdwg.mxu0
    %v1517 = vld [vmem:[%s8] sm:$0xf]
    %v1519 = vlaneseq
    %v1520 = vshrl.u32 %v1519, 7
    %v1521 = vsub.s32 0, %v1520
    %v1522 = vrot.slane %v1517, %v1521
    %v1523 = vlaneseq
    %v1524 = vshrl.u32 %v1523, 7
    %v1525 = vsub.s32 2, %v1524
    %v1526 = vrot.slane %v1517, %v1525
    %v1529 = vlaneseq
    %v1530 = vshrl.u32 %v1529, 7
    %v1531 = vsub.s32 0, %v1530
    %v1532 = vrot.slane %v1522, %v1531
    %v1533 = vlaneseq
    %v1534 = vshrl.u32 %v1533, 7
    %v1535 = vsub.s32 0, %v1534
    %v1536 = vrot.slane %v1526, %v1535
    %v1537 = vmul.f32 %v1509, %v1532
    %v1538 = vmul.f32 %v1511, %v1536
    %v1539 = vmul.f32 %v1513, %v1532
    %v1540 = vmul.f32 %v1515, %v1536
    %v1541 = vlaneseq
    %v1542 = vshrl.u32 %v1541, 7
    %v1543 = vsub.s32 1, %v1542
    %v1544 = vrot.slane %v1517, %v1543
    %v1545 = vlaneseq
    %v1546 = vshrl.u32 %v1545, 7
    %v1547 = vsub.s32 3, %v1546
    %v1548 = vrot.slane %v1517, %v1547
    %v1551 = vlaneseq
    %v1552 = vshrl.u32 %v1551, 7
    %v1553 = vsub.s32 1, %v1552
    %v1554 = vrot.slane %v1544, %v1553
    %v1555 = vlaneseq
    %v1556 = vshrl.u32 %v1555, 7
    %v1557 = vsub.s32 1, %v1556
    %v1558 = vrot.slane %v1548, %v1557
    %v1559 = vadd.f32 %v1537, %v1554
    %v1560 = vadd.f32 %v1538, %v1558
    %v1561 = vadd.f32 %v1539, %v1554
    %v1562 = vadd.f32 %v1540, %v1558
    %vm1563 = vcmp.ge.f32.partialorder %v1559, 0.0
    %vm1564 = vcmp.ge.f32.partialorder %v1560, 0.0
    %vm1565 = vcmp.ge.f32.partialorder %v1561, 0.0
    %vm1566 = vcmp.ge.f32.partialorder %v1562, 0.0
    %v1567 = vsel %vm1563, 1.0, -1.0
    %v1568 = vsel %vm1564, 1.0, -1.0
    %v1569 = vsel %vm1565, 1.0, -1.0
    %v1570 = vsel %vm1566, 1.0, -1.0
    %v1571 = vpack.c.bf16 %v1569, %v1567
    %v1572 = vpack.c.bf16 %v1570, %v1568
    %v1573 = vld [vmem:[#allocation10] sm:$0xff]
    %v1574 = vld [vmem:[#allocation10 + $0x8] sm:$0xff]
    %v1575 = vld [vmem:[#allocation10 + $0x10] sm:$0xff]
    %v1576 = vld [vmem:[#allocation10 + $0x18] sm:$0xff]
    %v1577 = vld [vmem:[#allocation10 + $0x20] sm:$0xff]
    %v1578 = vld [vmem:[#allocation10 + $0x28] sm:$0xff]
    %v1579 = vld [vmem:[#allocation10 + $0x30] sm:$0xff]
    %v1580 = vld [vmem:[#allocation10 + $0x38] sm:$0xff]
    %v1581 = vld [vmem:[#allocation10 + $0x40] sm:$0xff]
    %v1582 = vld [vmem:[#allocation10 + $0x48] sm:$0xff]
    %v1583 = vld [vmem:[#allocation10 + $0x50] sm:$0xff]
    %v1584 = vld [vmem:[#allocation10 + $0x58] sm:$0xff]
    %v1585 = vld [vmem:[#allocation10 + $0x60] sm:$0xff]
    %v1586 = vld [vmem:[#allocation10 + $0x68] sm:$0xff]
    %v1587 = vld [vmem:[#allocation10 + $0x70] sm:$0xff]
    %v1588 = vld [vmem:[#allocation10 + $0x78] sm:$0xff]
    %v1589 = vld [vmem:[#allocation10 + $0x80] sm:$0xff]
    %v1590 = vld [vmem:[#allocation10 + $0x88] sm:$0xff]
    %v1591 = vld [vmem:[#allocation10 + $0x90] sm:$0xff]
    %v1592 = vld [vmem:[#allocation10 + $0x98] sm:$0xff]
    %v1593 = vld [vmem:[#allocation10 + $0xa0] sm:$0xff]
    %v1594 = vld [vmem:[#allocation10 + $0xa8] sm:$0xff]
    %v1595 = vld [vmem:[#allocation10 + $0xb0] sm:$0xff]
    %v1596 = vld [vmem:[#allocation10 + $0xb8] sm:$0xff]
    %v1597 = vld [vmem:[#allocation10 + $0xc0] sm:$0xff]
    %v1598 = vld [vmem:[#allocation10 + $0xc8] sm:$0xff]
    %v1599 = vld [vmem:[#allocation10 + $0xd0] sm:$0xff]
    %v1600 = vld [vmem:[#allocation10 + $0xd8] sm:$0xff]
    %v1601 = vld [vmem:[#allocation10 + $0xe0] sm:$0xff]
    %v1602 = vld [vmem:[#allocation10 + $0xe8] sm:$0xff]
    %v1603 = vld [vmem:[#allocation10 + $0xf0] sm:$0xff]
    %v1604 = vld [vmem:[#allocation10 + $0xf8] sm:$0xff]
    %v1637 = vunpack.c.l.b16 %v1573
    %v1638 = vunpack.c.h.b16 %v1573
    %v1639 = vunpack.c.l.b16 %v1574
    %v1640 = vunpack.c.h.b16 %v1574
    %v1641 = vunpack.c.l.b16 %v1575
    %v1642 = vunpack.c.h.b16 %v1575
    %v1643 = vunpack.c.l.b16 %v1576
    %v1644 = vunpack.c.h.b16 %v1576
    %v1645 = vunpack.c.l.b16 %v1577
    %v1646 = vunpack.c.h.b16 %v1577
    %v1647 = vunpack.c.l.b16 %v1578
    %v1648 = vunpack.c.h.b16 %v1578
    %v1649 = vunpack.c.l.b16 %v1579
    %v1650 = vunpack.c.h.b16 %v1579
    %v1651 = vunpack.c.l.b16 %v1580
    %v1652 = vunpack.c.h.b16 %v1580
    %v1653 = vunpack.c.l.b16 %v1581
    %v1654 = vunpack.c.h.b16 %v1581
    %v1655 = vunpack.c.l.b16 %v1582
    %v1656 = vunpack.c.h.b16 %v1582
    %v1657 = vunpack.c.l.b16 %v1583
    %v1658 = vunpack.c.h.b16 %v1583
    %v1659 = vunpack.c.l.b16 %v1584
    %v1660 = vunpack.c.h.b16 %v1584
    %v1661 = vunpack.c.l.b16 %v1585
    %v1662 = vunpack.c.h.b16 %v1585
    %v1663 = vunpack.c.l.b16 %v1586
    %v1664 = vunpack.c.h.b16 %v1586
    %v1665 = vunpack.c.l.b16 %v1587
    %v1666 = vunpack.c.h.b16 %v1587
    %v1667 = vunpack.c.l.b16 %v1588
    %v1668 = vunpack.c.h.b16 %v1588
    %v1669 = vunpack.c.l.b16 %v1589
    %v1670 = vunpack.c.h.b16 %v1589
    %v1671 = vunpack.c.l.b16 %v1590
    %v1672 = vunpack.c.h.b16 %v1590
    %v1673 = vunpack.c.l.b16 %v1591
    %v1674 = vunpack.c.h.b16 %v1591
    %v1675 = vunpack.c.l.b16 %v1592
    %v1676 = vunpack.c.h.b16 %v1592
    %v1677 = vunpack.c.l.b16 %v1593
    %v1678 = vunpack.c.h.b16 %v1593
    %v1679 = vunpack.c.l.b16 %v1594
    %v1680 = vunpack.c.h.b16 %v1594
    %v1681 = vunpack.c.l.b16 %v1595
    %v1682 = vunpack.c.h.b16 %v1595
    %v1683 = vunpack.c.l.b16 %v1596
    %v1684 = vunpack.c.h.b16 %v1596
    %v1685 = vunpack.c.l.b16 %v1597
    %v1686 = vunpack.c.h.b16 %v1597
    %v1687 = vunpack.c.l.b16 %v1598
    %v1688 = vunpack.c.h.b16 %v1598
    %v1689 = vunpack.c.l.b16 %v1599
    %v1690 = vunpack.c.h.b16 %v1599
    %v1691 = vunpack.c.l.b16 %v1600
    %v1692 = vunpack.c.h.b16 %v1600
    %v1693 = vunpack.c.l.b16 %v1601
    %v1694 = vunpack.c.h.b16 %v1601
    %v1695 = vunpack.c.l.b16 %v1602
    %v1696 = vunpack.c.h.b16 %v1602
    %v1697 = vunpack.c.l.b16 %v1603
    %v1698 = vunpack.c.h.b16 %v1603
    %v1699 = vunpack.c.l.b16 %v1604
    %v1700 = vunpack.c.h.b16 %v1604
    %v1701 = vpack.c.b16 %v1639, %v1637
    %v1702 = vpack.c.b16 %v1640, %v1638
    %v1703 = vpack.c.b16 %v1643, %v1641
    %v1704 = vpack.c.b16 %v1644, %v1642
    %v1705 = vpack.c.b16 %v1647, %v1645
    %v1706 = vpack.c.b16 %v1648, %v1646
    %v1707 = vpack.c.b16 %v1651, %v1649
    %v1708 = vpack.c.b16 %v1652, %v1650
    %v1709 = vpack.c.b16 %v1655, %v1653
    %v1710 = vpack.c.b16 %v1656, %v1654
    %v1711 = vpack.c.b16 %v1659, %v1657
    %v1712 = vpack.c.b16 %v1660, %v1658
    %v1713 = vpack.c.b16 %v1663, %v1661
    %v1714 = vpack.c.b16 %v1664, %v1662
    %v1715 = vpack.c.b16 %v1667, %v1665
    %v1716 = vpack.c.b16 %v1668, %v1666
    %v1717 = vpack.c.b16 %v1671, %v1669
    %v1718 = vpack.c.b16 %v1672, %v1670
    %v1719 = vpack.c.b16 %v1675, %v1673
    %v1720 = vpack.c.b16 %v1676, %v1674
    %v1721 = vpack.c.b16 %v1679, %v1677
    %v1722 = vpack.c.b16 %v1680, %v1678
    %v1723 = vpack.c.b16 %v1683, %v1681
    %v1724 = vpack.c.b16 %v1684, %v1682
    %v1725 = vpack.c.b16 %v1687, %v1685
    %v1726 = vpack.c.b16 %v1688, %v1686
    %v1727 = vpack.c.b16 %v1691, %v1689
    %v1728 = vpack.c.b16 %v1692, %v1690
    %v1729 = vpack.c.b16 %v1695, %v1693
    %v1730 = vpack.c.b16 %v1696, %v1694
    %v1731 = vpack.c.b16 %v1699, %v1697
    %v1732 = vpack.c.b16 %v1700, %v1698
    %1765 = vmatprep.subr.bf16.mxu0 %v1702
    %1766 = vmatpush1.bf16.msra.mxu0 %v1701
    %1767 = vmatprep.subr.bf16.mxu0 %v1704
    %1768 = vmatpush1.bf16.msra.mxu0 %v1703
    %1769 = vmatprep.subr.bf16.mxu0 %v1706
    %1770 = vmatpush1.bf16.msra.mxu0 %v1705
    %1771 = vmatprep.subr.bf16.mxu0 %v1708
    %1772 = vmatpush1.bf16.msra.mxu0 %v1707
    %1773 = vmatprep.subr.bf16.mxu0 %v1710
    %1774 = vmatpush1.bf16.msra.mxu0 %v1709
    %1775 = vmatprep.subr.bf16.mxu0 %v1712
    %1776 = vmatpush1.bf16.msra.mxu0 %v1711
    %1777 = vmatprep.subr.bf16.mxu0 %v1714
    %1778 = vmatpush1.bf16.msra.mxu0 %v1713
    %1779 = vmatprep.subr.bf16.mxu0 %v1716
    %1780 = vmatpush1.bf16.msra.mxu0 %v1715
    %1781 = vmatprep.subr.bf16.mxu0 %v1718
    %1782 = vmatpush1.bf16.msra.mxu0 %v1717
    %1783 = vmatprep.subr.bf16.mxu0 %v1720
    %1784 = vmatpush1.bf16.msra.mxu0 %v1719
    %1785 = vmatprep.subr.bf16.mxu0 %v1722
    %1786 = vmatpush1.bf16.msra.mxu0 %v1721
    %1787 = vmatprep.subr.bf16.mxu0 %v1724
    %1788 = vmatpush1.bf16.msra.mxu0 %v1723
    %1789 = vmatprep.subr.bf16.mxu0 %v1726
    %1790 = vmatpush1.bf16.msra.mxu0 %v1725
    %1791 = vmatprep.subr.bf16.mxu0 %v1728
    %1792 = vmatpush1.bf16.msra.mxu0 %v1727
    %1793 = vmatprep.subr.bf16.mxu0 %v1730
    %1794 = vmatpush1.bf16.msra.mxu0 %v1729
    %1795 = vmatprep.subr.bf16.mxu0 %v1732
    %1796 = vmatpush1.bf16.msra.mxu0 %v1731
    %1797 = vmatprep.mubr.bf16.mxu0 %v1572
    %1798 = vmatmul.mubr.bf16.gmra.mrb[0].mxu0 %v1571
    %v1799 = vpop.f32.mrb[0].mxu0
    %v1800 = vadd.f32 0.0, %v1799
    %v1801 = vpop.f32.mrb[0].mxu0
    %v1802 = vadd.f32 0.0, %v1801
    %v1803 = vpop.f32.mrb[0].mxu0
    %v1804 = vadd.f32 0.0, %v1803
    %v1805 = vpop.f32.mrb[0].mxu0
    %v1806 = vadd.f32 0.0, %v1805
    %1807 = vdwg.mxu0
    %v1808 = vld [vmem:[%s9] sm:$0xf]
    %v1810 = vlaneseq
    %v1811 = vshrl.u32 %v1810, 7
    %v1812 = vsub.s32 0, %v1811
    %v1813 = vrot.slane %v1808, %v1812
    %v1814 = vlaneseq
    %v1815 = vshrl.u32 %v1814, 7
    %v1816 = vsub.s32 2, %v1815
    %v1817 = vrot.slane %v1808, %v1816
    %v1820 = vlaneseq
    %v1821 = vshrl.u32 %v1820, 7
    %v1822 = vsub.s32 0, %v1821
    %v1823 = vrot.slane %v1813, %v1822
    %v1824 = vlaneseq
    %v1825 = vshrl.u32 %v1824, 7
    %v1826 = vsub.s32 0, %v1825
    %v1827 = vrot.slane %v1817, %v1826
    %v1828 = vmul.f32 %v1800, %v1823
    %v1829 = vmul.f32 %v1802, %v1827
    %v1830 = vmul.f32 %v1804, %v1823
    %v1831 = vmul.f32 %v1806, %v1827
    %v1832 = vlaneseq
    %v1833 = vshrl.u32 %v1832, 7
    %v1834 = vsub.s32 1, %v1833
    %v1835 = vrot.slane %v1808, %v1834
    %v1836 = vlaneseq
    %v1837 = vshrl.u32 %v1836, 7
    %v1838 = vsub.s32 3, %v1837
    %v1839 = vrot.slane %v1808, %v1838
    %v1842 = vlaneseq
    %v1843 = vshrl.u32 %v1842, 7
    %v1844 = vsub.s32 1, %v1843
    %v1845 = vrot.slane %v1835, %v1844
    %v1846 = vlaneseq
    %v1847 = vshrl.u32 %v1846, 7
    %v1848 = vsub.s32 1, %v1847
    %v1849 = vrot.slane %v1839, %v1848
    %v1850 = vadd.f32 %v1828, %v1845
    %v1851 = vadd.f32 %v1829, %v1849
    %v1852 = vadd.f32 %v1830, %v1845
    %v1853 = vadd.f32 %v1831, %v1849
    %vm1854 = vcmp.ge.f32.partialorder %v1850, 0.0
    %vm1855 = vcmp.ge.f32.partialorder %v1851, 0.0
    %vm1856 = vcmp.ge.f32.partialorder %v1852, 0.0
    %vm1857 = vcmp.ge.f32.partialorder %v1853, 0.0
    %v1858 = vsel %vm1854, 1.0, -1.0
    %v1859 = vsel %vm1855, 1.0, -1.0
    %v1860 = vsel %vm1856, 1.0, -1.0
    %v1861 = vsel %vm1857, 1.0, -1.0
    %v1862 = vpack.c.bf16 %v1860, %v1858
    %v1863 = vpack.c.bf16 %v1861, %v1859
    %v1864 = vld [vmem:[#allocation11] sm:$0xf]
    %v1865 = vld [vmem:[#allocation11 + $0x4] sm:$0xf]
    %v1866 = vld [vmem:[#allocation11 + $0x8] sm:$0xf]
    %v1867 = vld [vmem:[#allocation11 + $0xc] sm:$0xf]
    %v1868 = vld [vmem:[#allocation11 + $0x10] sm:$0xf]
    %v1869 = vld [vmem:[#allocation11 + $0x14] sm:$0xf]
    %v1870 = vld [vmem:[#allocation11 + $0x18] sm:$0xf]
    %v1871 = vld [vmem:[#allocation11 + $0x1c] sm:$0xf]
    %v1872 = vld [vmem:[#allocation11 + $0x20] sm:$0xf]
    %v1873 = vld [vmem:[#allocation11 + $0x24] sm:$0xf]
    %v1874 = vld [vmem:[#allocation11 + $0x28] sm:$0xf]
    %v1875 = vld [vmem:[#allocation11 + $0x2c] sm:$0xf]
    %v1876 = vld [vmem:[#allocation11 + $0x30] sm:$0xf]
    %v1877 = vld [vmem:[#allocation11 + $0x34] sm:$0xf]
    %v1878 = vld [vmem:[#allocation11 + $0x38] sm:$0xf]
    %v1879 = vld [vmem:[#allocation11 + $0x3c] sm:$0xf]
    %v1880 = vld [vmem:[#allocation11 + $0x40] sm:$0xf]
    %v1881 = vld [vmem:[#allocation11 + $0x44] sm:$0xf]
    %v1882 = vld [vmem:[#allocation11 + $0x48] sm:$0xf]
    %v1883 = vld [vmem:[#allocation11 + $0x4c] sm:$0xf]
    %v1884 = vld [vmem:[#allocation11 + $0x50] sm:$0xf]
    %v1885 = vld [vmem:[#allocation11 + $0x54] sm:$0xf]
    %v1886 = vld [vmem:[#allocation11 + $0x58] sm:$0xf]
    %v1887 = vld [vmem:[#allocation11 + $0x5c] sm:$0xf]
    %v1888 = vld [vmem:[#allocation11 + $0x60] sm:$0xf]
    %v1889 = vld [vmem:[#allocation11 + $0x64] sm:$0xf]
    %v1890 = vld [vmem:[#allocation11 + $0x68] sm:$0xf]
    %v1891 = vld [vmem:[#allocation11 + $0x6c] sm:$0xf]
    %v1892 = vld [vmem:[#allocation11 + $0x70] sm:$0xf]
    %v1893 = vld [vmem:[#allocation11 + $0x74] sm:$0xf]
    %v1894 = vld [vmem:[#allocation11 + $0x78] sm:$0xf]
    %v1895 = vld [vmem:[#allocation11 + $0x7c] sm:$0xf]
    %v1928 = vunpack.c.l.b16 %v1864
    %v1929 = vunpack.c.l.b16 %v1865
    %v1930 = vunpack.c.l.b16 %v1866
    %v1931 = vunpack.c.l.b16 %v1867
    %v1932 = vunpack.c.l.b16 %v1868
    %v1933 = vunpack.c.l.b16 %v1869
    %v1934 = vunpack.c.l.b16 %v1870
    %v1935 = vunpack.c.l.b16 %v1871
    %v1936 = vunpack.c.l.b16 %v1872
    %v1937 = vunpack.c.l.b16 %v1873
    %v1938 = vunpack.c.l.b16 %v1874
    %v1939 = vunpack.c.l.b16 %v1875
    %v1940 = vunpack.c.l.b16 %v1876
    %v1941 = vunpack.c.l.b16 %v1877
    %v1942 = vunpack.c.l.b16 %v1878
    %v1943 = vunpack.c.l.b16 %v1879
    %v1944 = vunpack.c.l.b16 %v1880
    %v1945 = vunpack.c.l.b16 %v1881
    %v1946 = vunpack.c.l.b16 %v1882
    %v1947 = vunpack.c.l.b16 %v1883
    %v1948 = vunpack.c.l.b16 %v1884
    %v1949 = vunpack.c.l.b16 %v1885
    %v1950 = vunpack.c.l.b16 %v1886
    %v1951 = vunpack.c.l.b16 %v1887
    %v1952 = vunpack.c.l.b16 %v1888
    %v1953 = vunpack.c.l.b16 %v1889
    %v1954 = vunpack.c.l.b16 %v1890
    %v1955 = vunpack.c.l.b16 %v1891
    %v1956 = vunpack.c.l.b16 %v1892
    %v1957 = vunpack.c.l.b16 %v1893
    %v1958 = vunpack.c.l.b16 %v1894
    %v1959 = vunpack.c.l.b16 %v1895
    %v1960 = vpack.c.b16 %v1929, %v1928
    %v1961 = vpack.c.b16 %v1931, %v1930
    %v1962 = vpack.c.b16 %v1933, %v1932
    %v1963 = vpack.c.b16 %v1935, %v1934
    %v1964 = vpack.c.b16 %v1937, %v1936
    %v1965 = vpack.c.b16 %v1939, %v1938
    %v1966 = vpack.c.b16 %v1941, %v1940
    %v1967 = vpack.c.b16 %v1943, %v1942
    %v1968 = vpack.c.b16 %v1945, %v1944
    %v1969 = vpack.c.b16 %v1947, %v1946
    %v1970 = vpack.c.b16 %v1949, %v1948
    %v1971 = vpack.c.b16 %v1951, %v1950
    %v1972 = vpack.c.b16 %v1953, %v1952
    %v1973 = vpack.c.b16 %v1955, %v1954
    %v1974 = vpack.c.b16 %v1957, %v1956
    %v1975 = vpack.c.b16 %v1959, %v1958
    %1992 = vmatprep.subr.bf16.mxu0 0
    %1993 = vmatpush1.bf16.msra.mxu0 %v1960
    %1994 = vmatprep.subr.bf16.mxu0 0
    %1995 = vmatpush1.bf16.msra.mxu0 %v1961
    %1996 = vmatprep.subr.bf16.mxu0 0
    %1997 = vmatpush1.bf16.msra.mxu0 %v1962
    %1998 = vmatprep.subr.bf16.mxu0 0
    %1999 = vmatpush1.bf16.msra.mxu0 %v1963
    %2000 = vmatprep.subr.bf16.mxu0 0
    %2001 = vmatpush1.bf16.msra.mxu0 %v1964
    %2002 = vmatprep.subr.bf16.mxu0 0
    %2003 = vmatpush1.bf16.msra.mxu0 %v1965
    %2004 = vmatprep.subr.bf16.mxu0 0
    %2005 = vmatpush1.bf16.msra.mxu0 %v1966
    %2006 = vmatprep.subr.bf16.mxu0 0
    %2007 = vmatpush1.bf16.msra.mxu0 %v1967
    %2008 = vmatprep.subr.bf16.mxu0 0
    %2009 = vmatpush1.bf16.msra.mxu0 %v1968
    %2010 = vmatprep.subr.bf16.mxu0 0
    %2011 = vmatpush1.bf16.msra.mxu0 %v1969
    %2012 = vmatprep.subr.bf16.mxu0 0
    %2013 = vmatpush1.bf16.msra.mxu0 %v1970
    %2014 = vmatprep.subr.bf16.mxu0 0
    %2015 = vmatpush1.bf16.msra.mxu0 %v1971
    %2016 = vmatprep.subr.bf16.mxu0 0
    %2017 = vmatpush1.bf16.msra.mxu0 %v1972
    %2018 = vmatprep.subr.bf16.mxu0 0
    %2019 = vmatpush1.bf16.msra.mxu0 %v1973
    %2020 = vmatprep.subr.bf16.mxu0 0
    %2021 = vmatpush1.bf16.msra.mxu0 %v1974
    %2022 = vmatprep.subr.bf16.mxu0 0
    %2023 = vmatpush1.bf16.msra.mxu0 %v1975
    %2024 = vmatprep.mubr.bf16.mxu0 %v1863
    %2025 = vmatmul.mubr.bf16.gmra.mrb[0].mxu0 %v1862
    %v2026 = vpop.f32.mrb[0].mxu0
    %v2027 = vadd.f32 0.0, %v2026
    %v2028 = vpop.f32.mrb[0].mxu0
    %v2029 = vpop.f32.mrb[0].mxu0
    %v2030 = vadd.f32 0.0, %v2029
    %v2031 = vpop.f32.mrb[0].mxu0
    %2032 = vdwg.mxu0
    %v2033 = vld [vmem:[%s10] sm:$0x3]
    %v2034 = vlaneseq
    %v2035 = vshrl.u32 %v2034, 7
    %v2036 = vsub.s32 0, %v2035
    %v2037 = vrot.slane %v2033, %v2036
    %v2038 = vmul.f32 %v2027, %v2037
    %v2039 = vmul.f32 %v2030, %v2037
    %v2040 = vlaneseq
    %v2041 = vshrl.u32 %v2040, 7
    %v2042 = vsub.s32 1, %v2041
    %v2043 = vrot.slane %v2033, %v2042
    %v2044 = vadd.f32 %v2038, %v2043
    %v2045 = vadd.f32 %v2039, %v2043
    %2046 = vmax.xlane.f32.xlu0 %v2044
    %v2047 = vpop.xlane.xlu0 %2046
    %2048 = vmax.xlane.f32.xlu0 %v2045
    %v2049 = vpop.xlane.xlu0 %2048
    %v2050 = vsub.f32 %v2044, %v2047
    %v2051 = vsub.f32 %v2045, %v2049
    %v2052 = vmul.f32 %v2050, 1.442695
    %v2053 = vpow.pop %v2052
    %v2054 = vmul.f32 %v2051, 1.442695
    %v2055 = vpow.pop %v2054
    %2056 = vadd.xlane.f32.xlu0 %v2053
    %v2057 = vpop.xlane.xlu0 %2056
    %2058 = vadd.xlane.f32.xlu0 %v2055
    %v2059 = vpop.xlane.xlu0 %2058
    %v2060 = vrcp.pop %v2057
    %v2061 = vrcp.pop %v2059
    %v2062 = vmul.f32 %v2053, %v2060
    %v2063 = vmul.f32 %v2055, %v2061
    %2064 = vst [vmem:[#allocation13] sm:$0xff] %v2062
    %2065 = vst [vmem:[#allocation13 + $0x8] sm:$0xff] %v2063
    // Predicated region
    $region70: #{tpu_custom_call.1} parent=1 // pred_check
      _
    $region71: #{tpu_custom_call.1} parent=1 // pred_check_branch
      %2067 = sbr.rel (0) target = $region73
    $region72: #{tpu_custom_call.1} parent=1 // pred_region
      %s2069 = ssub.s32 256, 256
      %2070 = vsyncadd [#allocation4], %s2069
      %s2071 = sshll.u32 [#allocation13], 4
      %s2072 = int_to_ptr.vmem [resolvable:$true] %s2071
      %2077 = dma.vmem_to_hbm [thread:$0]  %s2072, 256, %s11, [#allocation4], 128, 128, 8
    $region73: #{tpu_custom_call.1} parent=1 // pred_fallthru
      _
    // Predicated region
    $region74: #{tpu_custom_call.1} parent=1 // pred_check
      _
    $region75: #{tpu_custom_call.1} parent=1 // pred_check_branch
      %2079 = sbr.rel (0) target = $region77
    $region76: #{tpu_custom_call.1} parent=1 // pred_region
      %2080 = dma.done [#allocation4], 256
    $region77: #{tpu_custom_call.1} parent=1 // pred_fallthru
      _
    %2081 = vsyncpa [#allocation3], 1
    %2082 = vsyncpa [#allocation6], 1
    %2083 = vsyncpa [#allocation9], 1
    %2084 = vsyncpa [#allocation12], 1
    %2085 = vsyncpa [#allocation4], 1

</llo_original>
